<compile_context>
chip_gen: v7x
topology: tpu7x:2x2x1
jax: 0.10.0
libtpu: 0.0.40
codegen_flags: <defaults>
</compile_context>

<pallas_src>
import numpy as np
import jax
import jax.numpy as jnp
from jax.experimental import pallas as pl
from jax.experimental.pallas import tpu as pltpu

TS = 128    # row-point tile (sublane direction; the set that is minimized over)
TT = 128    # column-point tile (lane direction; the per-point-minimum outputs)
BIG = 1e9   # finite sentinel added to ||p||^2 of rows outside the row set


# --------------------------------------------------------------------------
# Kernel 1: channel-any + 3x3x3 neighbor sum + edge detection
# --------------------------------------------------------------------------
def _edges_kernel(x_ref, out_ref):
    # x_ref: (1, C, D+2, H+2, W+2)  out_ref: (1, D, H, W)
    x = x_ref[0]                                                 # [C, Dp, Hp, Wp]
    combined = jnp.max(jnp.where(x > 0, 1.0, 0.0).astype(jnp.float32), axis=0)
    Dp, Hp, Wp = combined.shape
    D, H, W = Dp - 2, Hp - 2, Wp - 2
    # separable all-ones 3x3x3 convolution (valid) on the padded mask
    sw = combined[:, :, 0:W] + combined[:, :, 1:W + 1] + combined[:, :, 2:W + 2]
    sh = sw[:, 0:H, :] + sw[:, 1:H + 1, :] + sw[:, 2:H + 2, :]
    neighbors = sh[0:D] + sh[1:D + 1] + sh[2:D + 2]              # [D, H, W]
    interior = combined[1:D + 1, 1:H + 1, 1:W + 1]
    edges = jnp.logical_and(neighbors > 0, interior == 0)
    out_ref[0] = edges.astype(jnp.float32)


def _edges(x_padded, D, H, W):
    # TODO(synk): for realistic volumes (e.g. 128^3) tile over depth and emit a
    # lane-dense flattened output instead of whole-volume blocks.
    B, C, Dp, Hp, Wp = x_padded.shape
    return pl.pallas_call(
        _edges_kernel,
        out_shape=jax.ShapeDtypeStruct((B, D, H, W), jnp.float32),
        grid=(B,),
        in_specs=[pl.BlockSpec((1, C, Dp, Hp, Wp), lambda b: (b, 0, 0, 0, 0))],
        out_specs=pl.BlockSpec((1, D, H, W), lambda b: (b, 0, 0, 0)),
        compiler_params=pltpu.CompilerParams(dimension_semantics=("parallel",)),
    )(x_padded)


# --------------------------------------------------------------------------
# Kernel 2: fused batch + both directed min-distance passes (MXU formulation)
# --------------------------------------------------------------------------
def _hd_min_kernel(occ_ref, src_ref, tgt_ref, out_ref, acc_ref):
    b = pl.program_id(0)
    j = pl.program_id(1)
    i = pl.program_id(2)
    ni = pl.num_programs(2)

    @pl.when(i == 0)
    def _():
        acc_ref[...] = jnp.full(acc_ref.shape, jnp.inf, dtype=acc_ref.dtype)

    # TS == TT, so one occupancy table (per 128-point tile, per batch) serves
    # both the row (i) and the column (j) tiles.
    row_occ = occ_ref[b * ni + i]
    col_occ = occ_ref[b * ni + j]

    @pl.when(jnp.logical_and(row_occ > 0, col_occ > 0))
    def _():
        s = src_ref[0]      # [TS, 8]: -2z, -2y, -2x, n_adj_tg, n_adj_in, 0, 0, 0
        t = tgt_ref[0]      # [8, TT]:   z,   y,   x, 0, 0, |q|^2, in_mask, tg_mask
        # MXU cross term p'.q = -2 p.q (the norm columns of s hit zero rows of t).
        cross = jnp.dot(s, t, preferred_element_type=jnp.float32)   # [TS, TT]
        base = t[5:6, :] + cross                                    # |q|^2 - 2 p.q
        d2_tg = s[:, 3:4] + base      # rows restricted (via BIG) to target edges
        d2_in = s[:, 4:5] + base      # rows restricted (via BIG) to input edges
        tile_min = jnp.concatenate(
            [jnp.min(d2_tg, axis=0, keepdims=True),
             jnp.min(d2_in, axis=0, keepdims=True)], axis=0)        # [2, TT]
        acc_ref[...] = jnp.minimum(acc_ref[...], tile_min)

    @pl.when(i == ni - 1)
    def _():
        masks = tgt_ref[0][6:8, :]                        # [2, TT]: in_m, tg_m
        d = jnp.sqrt(jnp.maximum(acc_ref[...], 0.0))      # [2, TT]
        # zero out non-source voxels so the outer max ignores them
        out_ref[0] = jnp.where(masks > 0.0, d, 0.0)


def _min_dists(occ, src, tgt):
    B, Np, _ = src.shape
    ni = Np // TS
    nj = Np // TT
    return pl.pallas_call(
        _hd_min_kernel,
        out_shape=jax.ShapeDtypeStruct((B, 2, Np), jnp.float32),
        grid_spec=pltpu.PrefetchScalarGridSpec(
            num_scalar_prefetch=1,
            grid=(B, nj, ni),
            in_specs=[
                pl.BlockSpec((1, TS, 8), lambda b, j, i, occ_ref: (b, i, 0)),
                pl.BlockSpec((1, 8, TT), lambda b, j, i, occ_ref: (b, 0, j)),
            ],
            out_specs=pl.BlockSpec((1, 2, TT), lambda b, j, i, occ_ref: (b, 0, j)),
            scratch_shapes=[pltpu.VMEM((2, TT), jnp.float32)],
        ),
        compiler_params=pltpu.CompilerParams(
            dimension_semantics=("parallel", "parallel", "arbitrary")),
    )(occ, src, tgt)


# --------------------------------------------------------------------------
# Wrapper (glue): padding, coordinate grids, point layout, occupancy flags
# --------------------------------------------------------------------------
def hausdorff_distance(inputs, targets):
    # TODO(synk): percentile HD (e.g. HD95) needs a quantile over a
    # variable-length point set; only percentile=None (standard HD) is done.
    B, C, D, H, W = inputs.shape
    pad_cfg = ((0, 0), (0, 0), (1, 1), (1, 1), (1, 1))
    in_edges = _edges(jnp.pad(inputs.astype(jnp.float32), pad_cfg), D, H, W)
    tg_edges = _edges(jnp.pad(targets.astype(jnp.float32), pad_cfg), D, H, W)

    N = D * H * W
    Np = ((N + TS - 1) // TS) * TS            # TS == TT, single padded size
    zz, yy, xx = jnp.meshgrid(jnp.arange(D), jnp.arange(H), jnp.arange(W),
                              indexing="ij")
    coords = jnp.stack([zz.ravel(), yy.ravel(), xx.ravel()],
                       axis=0).astype(jnp.float32)               # [3, N]
    coords = jnp.pad(coords, ((0, 0), (0, Np - N)))              # [3, Np]
    norms = jnp.sum(coords * coords, axis=0)                     # [Np]

    in_m = jnp.pad(in_edges.reshape(B, N), ((0, 0), (0, Np - N)))   # [B, Np]
    tg_m = jnp.pad(tg_edges.reshape(B, N), ((0, 0), (0, Np - N)))

    cz = jnp.broadcast_to(coords[0], (B, Np))
    cy = jnp.broadcast_to(coords[1], (B, Np))
    cx = jnp.broadcast_to(coords[2], (B, Np))
    nb = jnp.broadcast_to(norms, (B, Np))
    zero = jnp.zeros((B, Np), jnp.float32)

    # Row points: (-2 * coords) so the MXU dot directly yields -2 p.q, plus the
    # per-direction mask-adjusted squared norms (BIG excludes out-of-set rows).
    src = jnp.stack([-2.0 * cz, -2.0 * cy, -2.0 * cx,
                     nb + (1.0 - tg_m) * BIG,     # dir 0: min over target edges
                     nb + (1.0 - in_m) * BIG,     # dir 1: min over input edges
                     zero, zero, zero], axis=-1)                 # [B, Np, 8]
    # Column points: coords, plain squared norm, plus the two finalize masks.
    tgt = jnp.stack([cz, cy, cx, zero, zero, nb, in_m, tg_m], axis=1)  # [B,8,Np]

    # Per-(batch, 128-point-tile) occupancy: skip tiles with no edge points.
    ni = Np // TS
    occ = ((in_m + tg_m).reshape(B, ni, TS).max(axis=2) > 0)
    occ = occ.astype(jnp.int32).reshape(-1)                      # [B * ni]

    mins = _min_dists(occ, src, tgt)                             # [B, 2, Np]
    hd = jnp.maximum(jnp.max(mins[:, 0, :], axis=1),
                     jnp.max(mins[:, 1, :], axis=1))
    empty = jnp.logical_or(jnp.sum(in_m, axis=1) == 0,
                           jnp.sum(tg_m, axis=1) == 0)
    return jnp.where(empty, jnp.inf, hd)


# --------------------------------------------------------------------------
# Pure-numpy reference (mirrors the PyTorch module, percentile=None)
# --------------------------------------------------------------------------
def _reference_hd(inputs, targets):
    B = inputs.shape[0]
    out = np.zeros(B, np.float32)
    for b in range(B):
        im = (inputs[b] > 0).any(0)
        tm = (targets[b] > 0).any(0)

        def edges(m):
            D, H, W = m.shape
            pm = np.pad(m.astype(np.float32), 1)
            nb = np.zeros(m.shape, np.float32)
            for dz in range(3):
                for dy in range(3):
                    for dx in range(3):
                        nb += pm[dz:dz + D, dy:dy + H, dx:dx + W]
            return (nb > 0) & (~m)

        ie, te = edges(im), edges(tm)
        if ie.sum() == 0 or te.sum() == 0:
            out[b] = np.inf
            continue
        ip = np.argwhere(ie).astype(np.float32)
        tp = np.argwhere(te).astype(np.float32)
        d_it = np.sqrt(((ip[:, None, :] - tp[None, :, :]) ** 2).sum(-1)).min(1)
        d_ti = np.sqrt(((tp[:, None, :] - ip[None, :, :]) ** 2).sum(-1)).min(1)
        out[b] = max(d_it.max(), d_ti.max())
    return out


if __name__ == "__main__":
    key = jax.random.PRNGKey(0)
    k1, k2 = jax.random.split(key)
    B, C, D, H, W = 2, 2, 8, 8, 8
    inputs = (jax.random.uniform(k1, (B, C, D, H, W)) > 0.7).astype(jnp.float32)
    targets = (jax.random.uniform(k2, (B, C, D, H, W)) > 0.7).astype(jnp.float32)

    out = jax.jit(hausdorff_distance)(inputs, targets)
    out = jax.block_until_ready(out)

    ref = _reference_hd(np.asarray(inputs), np.asarray(targets))
    np.testing.assert_allclose(np.asarray(out), ref, rtol=1e-5, atol=1e-5)
    print("KERNEL_OK")
</pallas_src>

<mosaic_0001>
module attributes {stable_mosaic.version = 11 : i64} {
  func.func @_edges_kernel(%arg0: i32, %arg1: memref<1x2x10x10x10xf32, #tpu.memory_space<vmem>>, %arg2: memref<1x8x8x8xf32, #tpu.memory_space<vmem>>) attributes {dimension_semantics = [#tpu.dimension_semantics<parallel>], iteration_bounds = array<i64: 2>, scalar_prefetch = 0 : i64, scratch_operands = 0 : i64, tpu.core_type = #tpu.core_type<tc>, window_params = [{transform_indices = @transform_0, window_bounds = array<i64: 1, 2, 10, 10, 10>}, {transform_indices = @transform_1, window_bounds = array<i64: 1, 8, 8, 8>}]} {
    %c0 = arith.constant 0 : index
    %c0_0 = arith.constant 0 : index
    %c0_1 = arith.constant 0 : index
    %c0_2 = arith.constant 0 : index
    %c0_3 = arith.constant 0 : index
    %0 = vector.load %arg1[%c0, %c0_0, %c0_1, %c0_2, %c0_3] : memref<1x2x10x10x10xf32, #tpu.memory_space<vmem>>, vector<1x2x10x10x10xf32>
    %1 = vector.shape_cast %0 : vector<1x2x10x10x10xf32> to vector<2x10x10x10xf32>
    %cst = arith.constant 0.000000e+00 : f32
    %2 = vector.broadcast %cst : f32 to vector<2x10x10x10xf32>
    %3 = arith.cmpf ogt, %1, %2 : vector<2x10x10x10xf32>
    %cst_4 = arith.constant 1.000000e+00 : f32
    %cst_5 = arith.constant 0.000000e+00 : f32
    %4 = vector.broadcast %cst_4 : f32 to vector<2x10x10x10xf32>
    %5 = vector.broadcast %cst_5 : f32 to vector<2x10x10x10xf32>
    %6 = arith.select %3, %4, %5 : vector<2x10x10x10xi1>, vector<2x10x10x10xf32>
    %cst_6 = arith.constant dense<0xFF800000> : vector<10x10x10xf32>
    %7 = vector.multi_reduction <maximumf>, %6, %cst_6 [0] : vector<2x10x10x10xf32> to vector<10x10x10xf32>
    %8 = vector.extract_strided_slice %7 {offsets = [0, 0, 0], sizes = [10, 10, 8], strides = [1, 1, 1]} : vector<10x10x10xf32> to vector<10x10x8xf32>
    %9 = vector.extract_strided_slice %7 {offsets = [0, 0, 1], sizes = [10, 10, 8], strides = [1, 1, 1]} : vector<10x10x10xf32> to vector<10x10x8xf32>
    %10 = arith.addf %8, %9 : vector<10x10x8xf32>
    %11 = vector.extract_strided_slice %7 {offsets = [0, 0, 2], sizes = [10, 10, 8], strides = [1, 1, 1]} : vector<10x10x10xf32> to vector<10x10x8xf32>
    %12 = arith.addf %10, %11 : vector<10x10x8xf32>
    %13 = vector.extract_strided_slice %12 {offsets = [0, 0, 0], sizes = [10, 8, 8], strides = [1, 1, 1]} : vector<10x10x8xf32> to vector<10x8x8xf32>
    %14 = vector.extract_strided_slice %12 {offsets = [0, 1, 0], sizes = [10, 8, 8], strides = [1, 1, 1]} : vector<10x10x8xf32> to vector<10x8x8xf32>
    %15 = arith.addf %13, %14 : vector<10x8x8xf32>
    %16 = vector.extract_strided_slice %12 {offsets = [0, 2, 0], sizes = [10, 8, 8], strides = [1, 1, 1]} : vector<10x10x8xf32> to vector<10x8x8xf32>
    %17 = arith.addf %15, %16 : vector<10x8x8xf32>
    %18 = vector.extract_strided_slice %17 {offsets = [0, 0, 0], sizes = [8, 8, 8], strides = [1, 1, 1]} : vector<10x8x8xf32> to vector<8x8x8xf32>
    %19 = vector.extract_strided_slice %17 {offsets = [1, 0, 0], sizes = [8, 8, 8], strides = [1, 1, 1]} : vector<10x8x8xf32> to vector<8x8x8xf32>
    %20 = arith.addf %18, %19 : vector<8x8x8xf32>
    %21 = vector.extract_strided_slice %17 {offsets = [2, 0, 0], sizes = [8, 8, 8], strides = [1, 1, 1]} : vector<10x8x8xf32> to vector<8x8x8xf32>
    %22 = arith.addf %20, %21 : vector<8x8x8xf32>
    %23 = vector.extract_strided_slice %7 {offsets = [1, 1, 1], sizes = [8, 8, 8], strides = [1, 1, 1]} : vector<10x10x10xf32> to vector<8x8x8xf32>
    %cst_7 = arith.constant 0.000000e+00 : f32
    %24 = vector.broadcast %cst_7 : f32 to vector<8x8x8xf32>
    %25 = arith.cmpf ogt, %22, %24 : vector<8x8x8xf32>
    %cst_8 = arith.constant 0.000000e+00 : f32
    %26 = vector.broadcast %cst_8 : f32 to vector<8x8x8xf32>
    %27 = arith.cmpf oeq, %23, %26 : vector<8x8x8xf32>
    %28 = arith.andi %25, %27 : vector<8x8x8xi1>
    %29 = arith.extui %28 : vector<8x8x8xi1> to vector<8x8x8xi32>
    %30 = arith.sitofp %29 : vector<8x8x8xi32> to vector<8x8x8xf32>
    %c0_9 = arith.constant 0 : index
    %c0_10 = arith.constant 0 : index
    %c0_11 = arith.constant 0 : index
    %c0_12 = arith.constant 0 : index
    %31 = vector.load %arg2[%c0_9, %c0_10, %c0_11, %c0_12] : memref<1x8x8x8xf32, #tpu.memory_space<vmem>>, vector<1x8x8x8xf32>
    %32 = vector.shape_cast %31 : vector<1x8x8x8xf32> to vector<8x8x8xf32>
    %33 = vector.shape_cast %30 : vector<8x8x8xf32> to vector<1x8x8x8xf32>
    tpu.vector_store %arg2[%c0_9, %c0_10, %c0_11, %c0_12], %33 {strides = array<i32>} : memref<1x8x8x8xf32, #tpu.memory_space<vmem>>, vector<1x8x8x8xf32>,
    return
  }
  func.func @transform_0(%arg0: i32) -> (i32, i32, i32, i32, i32) {
    %c0_i32 = arith.constant 0 : i32
    %c0_i32_0 = arith.constant 0 : i32
    %c0_i32_1 = arith.constant 0 : i32
    %c0_i32_2 = arith.constant 0 : i32
    %c0_i32_3 = arith.constant 0 : i32
    return %arg0, %c0_i32, %c0_i32_0, %c0_i32_1, %c0_i32_2 : i32, i32, i32, i32, i32
  }
  func.func @transform_1(%arg0: i32) -> (i32, i32, i32, i32) {
    %c0_i32 = arith.constant 0 : i32
    %c0_i32_0 = arith.constant 0 : i32
    %c0_i32_1 = arith.constant 0 : i32
    %c0_i32_2 = arith.constant 0 : i32
    return %arg0, %c0_i32, %c0_i32_0, %c0_i32_1 : i32, i32, i32, i32
  }
}

module attributes {stable_mosaic.version = 11 : i64} {
  func.func @_hd_min_kernel(%arg0: i32, %arg1: i32, %arg2: i32, %arg3: memref<8xi32, #tpu.memory_space<smem>>, %arg4: memref<1x128x8xf32, #tpu.memory_space<vmem>>, %arg5: memref<1x8x128xf32, #tpu.memory_space<vmem>>, %arg6: memref<1x2x128xf32, #tpu.memory_space<vmem>>, %arg7: memref<2x128xf32, #tpu.memory_space<vmem>>) attributes {dimension_semantics = [#tpu.dimension_semantics<parallel>, #tpu.dimension_semantics<parallel>, #tpu.dimension_semantics<arbitrary>], iteration_bounds = array<i64: 2, 4, 4>, scalar_prefetch = 1 : i64, scratch_operands = 1 : i64, tpu.core_type = #tpu.core_type<tc>, window_params = [{transform_indices = @transform_0, window_bounds = array<i64: 1, 128, 8>}, {transform_indices = @transform_1, window_bounds = array<i64: 1, 8, 128>}, {transform_indices = @transform_2, window_bounds = array<i64: 1, 2, 128>}]} {
    %c0_i32 = arith.constant 0 : i32
    %0 = arith.cmpi eq, %arg2, %c0_i32 : i32
    %1 = arith.extui %0 : i1 to i32
    %c0_i32_0 = arith.constant 0 : i32
    %2 = arith.cmpi ne, %1, %c0_i32_0 : i32
    scf.if %2 {
      %cst = arith.constant 0x7F800000 : f32
      %19 = vector.broadcast %cst : f32 to vector<2x128xf32>
      %c0 = arith.constant 0 : index
      %c0_6 = arith.constant 0 : index
      %20 = vector.load %arg7[%c0, %c0_6] : memref<2x128xf32, #tpu.memory_space<vmem>>, vector<2x128xf32>
      tpu.vector_store %arg7[%c0, %c0_6], %19 {strides = array<i32>} : memref<2x128xf32, #tpu.memory_space<vmem>>, vector<2x128xf32>,
    } else {
    }
    %c4_i32 = arith.constant 4 : i32
    %3 = arith.muli %arg0, %c4_i32 : i32
    %4 = arith.addi %3, %arg2 : i32
    %5 = arith.index_cast %4 : i32 to index
    %6 = memref.load %arg3[%5] : memref<8xi32, #tpu.memory_space<smem>>
    %c4_i32_1 = arith.constant 4 : i32
    %7 = arith.muli %arg0, %c4_i32_1 : i32
    %8 = arith.addi %7, %arg1 : i32
    %9 = arith.index_cast %8 : i32 to index
    %10 = memref.load %arg3[%9] : memref<8xi32, #tpu.memory_space<smem>>
    %c0_i32_2 = arith.constant 0 : i32
    %11 = arith.cmpi sgt, %6, %c0_i32_2 : i32
    %c0_i32_3 = arith.constant 0 : i32
    %12 = arith.cmpi sgt, %10, %c0_i32_3 : i32
    %13 = arith.andi %11, %12 : i1
    %14 = arith.extui %13 : i1 to i32
    %c0_i32_4 = arith.constant 0 : i32
    %15 = arith.cmpi ne, %14, %c0_i32_4 : i32
    scf.if %15 {
      %c0 = arith.constant 0 : index
      %c0_6 = arith.constant 0 : index
      %c0_7 = arith.constant 0 : index
      %19 = vector.load %arg4[%c0, %c0_6, %c0_7] : memref<1x128x8xf32, #tpu.memory_space<vmem>>, vector<1x128x8xf32>
      %20 = vector.shape_cast %19 : vector<1x128x8xf32> to vector<128x8xf32>
      %c0_8 = arith.constant 0 : index
      %c0_9 = arith.constant 0 : index
      %c0_10 = arith.constant 0 : index
      %21 = vector.load %arg5[%c0_8, %c0_9, %c0_10] : memref<1x8x128xf32, #tpu.memory_space<vmem>>, vector<1x8x128xf32>
      %22 = vector.shape_cast %21 : vector<1x8x128xf32> to vector<8x128xf32>
      %cst = arith.constant dense<0.000000e+00> : vector<128x128xf32>
      %23 = tpu.matmul %20, %22, %cst {dimension_numbers = #tpu.dot_dimension_numbers<[1], [0], [0], [1], [0, 0, 1, 1], [], []>} : vector<128x8xf32>, vector<8x128xf32>, vector<128x128xf32> -> vector<128x128xf32>
      %24 = vector.extract_strided_slice %22 {offsets = [5, 0], sizes = [1, 128], strides = [1, 1]} : vector<8x128xf32> to vector<1x128xf32>
      %25 = vector.broadcast %24 : vector<1x128xf32> to vector<128x128xf32>
      %26 = arith.addf %25, %23 : vector<128x128xf32>
      %27 = vector.extract_strided_slice %20 {offsets = [0, 3], sizes = [128, 1], strides = [1, 1]} : vector<128x8xf32> to vector<128x1xf32>
      %28 = vector.broadcast %27 : vector<128x1xf32> to vector<128x128xf32>
      %29 = arith.addf %28, %26 : vector<128x128xf32>
      %30 = vector.extract_strided_slice %20 {offsets = [0, 4], sizes = [128, 1], strides = [1, 1]} : vector<128x8xf32> to vector<128x1xf32>
      %31 = vector.broadcast %30 : vector<128x1xf32> to vector<128x128xf32>
      %32 = arith.addf %31, %26 : vector<128x128xf32>
      %cst_11 = arith.constant dense<0x7F800000> : vector<128xf32>
      %33 = vector.multi_reduction <minimumf>, %29, %cst_11 [0] : vector<128x128xf32> to vector<128xf32>
      %34 = vector.shape_cast %33 : vector<128xf32> to vector<1x128xf32>
      %cst_12 = arith.constant dense<0x7F800000> : vector<128xf32>
      %35 = vector.multi_reduction <minimumf>, %32, %cst_12 [0] : vector<128x128xf32> to vector<128xf32>
      %36 = vector.shape_cast %35 : vector<128xf32> to vector<1x128xf32>
      %37 = tpu.concatenate %34, %36 in 0 : vector<1x128xf32>, vector<1x128xf32> -> vector<2x128xf32>
      %c0_13 = arith.constant 0 : index
      %c0_14 = arith.constant 0 : index
      %38 = vector.load %arg7[%c0_13, %c0_14] : memref<2x128xf32, #tpu.memory_space<vmem>>, vector<2x128xf32>
      %39 = arith.minimumf %38, %37 : vector<2x128xf32>
      %c0_15 = arith.constant 0 : index
      %c0_16 = arith.constant 0 : index
      %40 = vector.load %arg7[%c0_15, %c0_16] : memref<2x128xf32, #tpu.memory_space<vmem>>, vector<2x128xf32>
      tpu.vector_store %arg7[%c0_15, %c0_16], %39 {strides = array<i32>} : memref<2x128xf32, #tpu.memory_space<vmem>>, vector<2x128xf32>,
    } else {
    }
    %c3_i32 = arith.constant 3 : i32
    %16 = arith.cmpi eq, %arg2, %c3_i32 : i32
    %17 = arith.extui %16 : i1 to i32
    %c0_i32_5 = arith.constant 0 : i32
    %18 = arith.cmpi ne, %17, %c0_i32_5 : i32
    scf.if %18 {
      %c0 = arith.constant 0 : index
      %c0_6 = arith.constant 0 : index
      %c0_7 = arith.constant 0 : index
      %19 = vector.load %arg5[%c0, %c0_6, %c0_7] : memref<1x8x128xf32, #tpu.memory_space<vmem>>, vector<1x8x128xf32>
      %20 = vector.shape_cast %19 : vector<1x8x128xf32> to vector<8x128xf32>
      %21 = vector.extract_strided_slice %20 {offsets = [6, 0], sizes = [2, 128], strides = [1, 1]} : vector<8x128xf32> to vector<2x128xf32>
      %c0_8 = arith.constant 0 : index
      %c0_9 = arith.constant 0 : index
      %22 = vector.load %arg7[%c0_8, %c0_9] : memref<2x128xf32, #tpu.memory_space<vmem>>, vector<2x128xf32>
      %cst = arith.constant 0.000000e+00 : f32
      %23 = vector.broadcast %cst : f32 to vector<2x128xf32>
      %24 = arith.maximumf %22, %23 : vector<2x128xf32>
      %25 = math.sqrt %24 : vector<2x128xf32>
      %cst_10 = arith.constant 0.000000e+00 : f32
      %26 = vector.broadcast %cst_10 : f32 to vector<2x128xf32>
      %27 = arith.cmpf ogt, %21, %26 : vector<2x128xf32>
      %cst_11 = arith.constant 0.000000e+00 : f32
      %28 = vector.broadcast %cst_11 : f32 to vector<2x128xf32>
      %29 = arith.select %27, %25, %28 : vector<2x128xi1>, vector<2x128xf32>
      %c0_12 = arith.constant 0 : index
      %c0_13 = arith.constant 0 : index
      %c0_14 = arith.constant 0 : index
      %30 = vector.load %arg6[%c0_12, %c0_13, %c0_14] : memref<1x2x128xf32, #tpu.memory_space<vmem>>, vector<1x2x128xf32>
      %31 = vector.shape_cast %30 : vector<1x2x128xf32> to vector<2x128xf32>
      %32 = vector.shape_cast %29 : vector<2x128xf32> to vector<1x2x128xf32>
      tpu.vector_store %arg6[%c0_12, %c0_13, %c0_14], %32 {strides = array<i32>} : memref<1x2x128xf32, #tpu.memory_space<vmem>>, vector<1x2x128xf32>,
    } else {
    }
    return
  }
  func.func @transform_0(%arg0: i32, %arg1: i32, %arg2: i32, %arg3: memref<8xi32, #tpu.memory_space<smem>>) -> (i32, i32, i32) {
    %c0_i32 = arith.constant 0 : i32
    %c0_i32_0 = arith.constant 0 : i32
    return %arg0, %arg2, %c0_i32 : i32, i32, i32
  }
  func.func @transform_1(%arg0: i32, %arg1: i32, %arg2: i32, %arg3: memref<8xi32, #tpu.memory_space<smem>>) -> (i32, i32, i32) {
    %c0_i32 = arith.constant 0 : i32
    %c0_i32_0 = arith.constant 0 : i32
    return %arg0, %c0_i32, %arg1 : i32, i32, i32
  }
  func.func @transform_2(%arg0: i32, %arg1: i32, %arg2: i32, %arg3: memref<8xi32, #tpu.memory_space<smem>>) -> (i32, i32, i32) {
    %c0_i32 = arith.constant 0 : i32
    %c0_i32_0 = arith.constant 0 : i32
    return %arg0, %c0_i32, %arg1 : i32, i32, i32
  }
}

</mosaic_0001>

<llo_original>
// kernel: hausdorff_distance.3
$region0: #{hausdorff_distance.3}
  #allocation0 [shape = 'u32[]', space=smem, size = 0x4, offset = 0x4, fixed_abs, tag = 'smem constant byte address 0x4 - core index']
  #allocation1 [shape = 'u32[144,128]{1,0:T(1,128)}', space=vmem, size = 0x12000, scoped, tag = 'internal scratch']
  %s0 = inlined_call_operand.vmem [shape: f32[2,2,10,10,10], index: 0, kind: input, shape index: {}]
  %s1 = inlined_call_operand.vmem [shape: f32[2,8,8,8], index: 1, kind: output, shape index: {}]
  %s2 = sld [smem:[#allocation0]]
  $region37: #{hausdorff_distance.3} parent=0
    _
  %s4 = ssub.s32 1, %s2
  %s5 = scalar_select 0, %s4, %s2
  loop: start=0, step=1, limit=4
  $region2: #{hausdorff_distance.3} parent=0 // loop_pre_header
    _
  $region3: #{hausdorff_distance.3} parent=0 // loop_header
    %s7 = sphi 0, %s11
    %p8 = scmp.ge.s32.totalorder %s7, 4
    %s17 = sphi 0, %s19
    %s20 = sphi 0, %s17
    %s21 = sphi 0, %s20
    %s37 = sphi 0, %s21
    %s43 = sphi 0, %s45
    %s46 = sphi 0, %s43
    %s47 = sphi 0, %s46
    %s63 = sphi 0, %s47
  $region4: #{hausdorff_distance.3} parent=0 // loop_header_branch
    %10 = sbr.rel (%p8) target = $region8
  $region5: #{hausdorff_distance.3} parent=0 // loop_body
    %s12 = ssub.s32 %s7, 1
    %s13 = ssub.s32 %s7, 2
    %s14 = sadd.s32 %s7, 1
    %s15 = ssub.s32 %s7, %s14
    %p16 = scmp.eq.s32.totalorder %s15, 0
    %s18 = sadd.s32 %s17, 1
    %s19 = scalar_select %p16, %s17, %s18
    %p22 = pneg %p16
    %p23 = scmp.eq.s32.totalorder %s7, 1
    %p24 = por %p22, %p23
    %p25 = scmp.ne.s32.totalorder %s17, %s20
    %p26 = scmp.eq.s32.totalorder %s7, 0
    %p27 = por %p25, %p26
    %p28 = scmp.ne.s32.totalorder %s17, %s20
    %p29 = scmp.eq.s32.totalorder %s12, 1
    %p30 = por %p28, %p29
    %p31 = scmp.ne.s32.totalorder %s20, %s21
    %p32 = scmp.eq.s32.totalorder %s12, 0
    %p33 = por %p31, %p32
    %p34 = scmp.ne.s32.totalorder %s20, %s21
    %p35 = scmp.eq.s32.totalorder %s13, 1
    %p36 = por %p34, %p35
    %p38 = scmp.ne.s32.totalorder %s21, %s37
    %p39 = scmp.eq.s32.totalorder %s13, 0
    %p40 = por %p38, %p39
    %s41 = ssub.s32 %s7, %s14
    %p42 = scmp.eq.s32.totalorder %s41, 0
    %s44 = sadd.s32 %s43, 1
    %s45 = scalar_select %p42, %s43, %s44
    %p48 = pneg %p42
    %p49 = scmp.eq.s32.totalorder %s7, 1
    %p50 = por %p48, %p49
    %p51 = scmp.ne.s32.totalorder %s43, %s46
    %p52 = scmp.eq.s32.totalorder %s7, 0
    %p53 = por %p51, %p52
    %p54 = scmp.ne.s32.totalorder %s43, %s46
    %p55 = scmp.eq.s32.totalorder %s12, 1
    %p56 = por %p54, %p55
    %p57 = scmp.ne.s32.totalorder %s46, %s47
    %p58 = scmp.eq.s32.totalorder %s12, 0
    %p59 = por %p57, %p58
    %p60 = scmp.ne.s32.totalorder %s46, %s47
    %p61 = scmp.eq.s32.totalorder %s13, 1
    %p62 = por %p60, %p61
    %p64 = scmp.ne.s32.totalorder %s47, %s63
    %p65 = scmp.eq.s32.totalorder %s13, 0
    %p66 = por %p64, %p65
    %p67 = scmp.le.s32.totalorder 1, %s7
    %p68 = scmp.lt.s32.totalorder %s7, 3
    %p69 = pnand %p67, %p68
    %p70 = pneg %p69
    // Predicated region
    $region9: #{hausdorff_distance.3} parent=5 // pred_check
      _
    $region10: #{hausdorff_distance.3} parent=5 // pred_check_branch
      %72 = sbr.rel (%p69) target = $region12
    $region11: #{hausdorff_distance.3} parent=5 // pred_region
      %s73 = ssub.s32 %s7, 1
    $region12: #{hausdorff_distance.3} parent=5 // pred_fallthru
      _
    %p74 = scmp.lt.s32.totalorder %s7, 2
    // Predicated region
    $region13: #{hausdorff_distance.3} parent=5 // pred_check
      %p75 = pneg %p74
    $region14: #{hausdorff_distance.3} parent=5 // pred_check_branch
      %77 = sbr.rel (%p75) target = $region16
    $region15: #{hausdorff_distance.3} parent=5 // pred_region
      // Predicated region
      $region17: #{hausdorff_distance.3} parent=15 // pred_check
        %p78 = pneg %p27
      $region18: #{hausdorff_distance.3} parent=15 // pred_check_branch
        %80 = sbr.rel (%p78) target = $region20
      $region19: #{hausdorff_distance.3} parent=15 // pred_region
        %p81 = scmp.lt.s32.totalorder %s7, 1
        %s82 = scalar_select %p81, %s7, 1
        %s83 = smul.addr %s82, 40
        %s84 = smul.addr %s83, 8
        %s85 = scalar_lea.vmem %s0, %s84
      $region20: #{hausdorff_distance.3} parent=15 // pred_fallthru
        _
    $region16: #{hausdorff_distance.3} parent=5 // pred_fallthru
      _
    %p86 = scmp.le.s32.totalorder 1, %s7
    %p87 = scmp.lt.s32.totalorder %s7, 3
    %p88 = pnand %p86, %p87
    %p89 = pneg %p88
    // Predicated region
    $region21: #{hausdorff_distance.3} parent=5 // pred_check
      _
    $region22: #{hausdorff_distance.3} parent=5 // pred_check_branch
      %91 = sbr.rel (%p88) target = $region24
    $region23: #{hausdorff_distance.3} parent=5 // pred_region
      %s92 = ssub.s32 %s7, 1
      %p93 = scmp.lt.s32.totalorder %s12, 1
      %s94 = scalar_select %p93, %s12, 1
      %s95 = smul.addr %s94, 40
      %s96 = smul.addr %s95, 8
      %s97 = scalar_lea.vmem %s0, %s96
      %p98 = pneg %p33
      %p99 = pneg %p30
      %p100 = pneg %p59
      %p101 = pneg %p56
      %p102 = scmp.lt.s32.totalorder %s12, 1
      %s103 = scalar_select %p102, %s12, 1
      %s104 = smul.addr %s103, 8
      %s105 = smul.addr %s104, 8
      %s106 = scalar_lea.vmem %s1, %s105
      %p107 = scmp.lt.s32.totalorder %s12, 1
      %s108 = scalar_select %p107, %s12, 1
      %s109 = smul.addr %s108, 40
      %s110 = smul.addr %s109, 8
      %s111 = scalar_lea.vmem %s0, %s110
      %p112 = scmp.lt.s32.totalorder %s12, 1
      %s113 = scalar_select %p112, %s12, 1
      %s114 = smul.addr %s113, 8
      %s115 = smul.addr %s114, 8
      %s116 = scalar_lea.vmem %s1, %s115
      %v117 = vld [vmem:[%s111] sm:$0xff]
      %v118 = vld [vmem:[%s111 + $0x8] sm:$0x3]
      %v119 = vld [vmem:[%s111 + $0x10] sm:$0xff]
      %v120 = vld [vmem:[%s111 + $0x18] sm:$0x3]
      %v121 = vld [vmem:[%s111 + $0x20] sm:$0xff]
      %v122 = vld [vmem:[%s111 + $0x28] sm:$0x3]
      %v123 = vld [vmem:[%s111 + $0x30] sm:$0xff]
      %v124 = vld [vmem:[%s111 + $0x38] sm:$0x3]
      %v125 = vld [vmem:[%s111 + $0x40] sm:$0xff]
      %v126 = vld [vmem:[%s111 + $0x48] sm:$0x3]
      %v127 = vld [vmem:[%s111 + $0x50] sm:$0xff]
      %v128 = vld [vmem:[%s111 + $0x58] sm:$0x3]
      %v129 = vld [vmem:[%s111 + $0x60] sm:$0xff]
      %v130 = vld [vmem:[%s111 + $0x68] sm:$0x3]
      %v131 = vld [vmem:[%s111 + $0x70] sm:$0xff]
      %v132 = vld [vmem:[%s111 + $0x78] sm:$0x3]
      %v133 = vld [vmem:[%s111 + $0x80] sm:$0xff]
      %v134 = vld [vmem:[%s111 + $0x88] sm:$0x3]
      %v135 = vld [vmem:[%s111 + $0x90] sm:$0xff]
      %v136 = vld [vmem:[%s111 + $0x98] sm:$0x3]
      %v137 = vld [vmem:[%s111 + $0xa0] sm:$0xff]
      %v138 = vld [vmem:[%s111 + $0xa8] sm:$0x3]
      %v139 = vld [vmem:[%s111 + $0xb0] sm:$0xff]
      %v140 = vld [vmem:[%s111 + $0xb8] sm:$0x3]
      %v141 = vld [vmem:[%s111 + $0xc0] sm:$0xff]
      %v142 = vld [vmem:[%s111 + $0xc8] sm:$0x3]
      %v143 = vld [vmem:[%s111 + $0xd0] sm:$0xff]
      %v144 = vld [vmem:[%s111 + $0xd8] sm:$0x3]
      %v145 = vld [vmem:[%s111 + $0xe0] sm:$0xff]
      %v146 = vld [vmem:[%s111 + $0xe8] sm:$0x3]
      %v147 = vld [vmem:[%s111 + $0xf0] sm:$0xff]
      %v148 = vld [vmem:[%s111 + $0xf8] sm:$0x3]
      %v149 = vld [vmem:[%s111 + $0x100] sm:$0xff]
      %v150 = vld [vmem:[%s111 + $0x108] sm:$0x3]
      %v151 = vld [vmem:[%s111 + $0x110] sm:$0xff]
      %v152 = vld [vmem:[%s111 + $0x118] sm:$0x3]
      %v153 = vld [vmem:[%s111 + $0x120] sm:$0xff]
      %v154 = vld [vmem:[%s111 + $0x128] sm:$0x3]
      %v155 = vld [vmem:[%s111 + $0x130] sm:$0xff]
      %v156 = vld [vmem:[%s111 + $0x138] sm:$0x3]
      %vm157 = vcmp.gt.f32.partialorder %v117, 0.0
      %vm158 = vcmp.gt.f32.partialorder %v118, 0.0
      %vm159 = vcmp.gt.f32.partialorder %v119, 0.0
      %vm160 = vcmp.gt.f32.partialorder %v120, 0.0
      %vm161 = vcmp.gt.f32.partialorder %v121, 0.0
      %vm162 = vcmp.gt.f32.partialorder %v122, 0.0
      %vm163 = vcmp.gt.f32.partialorder %v123, 0.0
      %vm164 = vcmp.gt.f32.partialorder %v124, 0.0
      %vm165 = vcmp.gt.f32.partialorder %v125, 0.0
      %vm166 = vcmp.gt.f32.partialorder %v126, 0.0
      %vm167 = vcmp.gt.f32.partialorder %v127, 0.0
      %vm168 = vcmp.gt.f32.partialorder %v128, 0.0
      %vm169 = vcmp.gt.f32.partialorder %v129, 0.0
      %vm170 = vcmp.gt.f32.partialorder %v130, 0.0
      %vm171 = vcmp.gt.f32.partialorder %v131, 0.0
      %vm172 = vcmp.gt.f32.partialorder %v132, 0.0
      %vm173 = vcmp.gt.f32.partialorder %v133, 0.0
      %vm174 = vcmp.gt.f32.partialorder %v134, 0.0
      %vm175 = vcmp.gt.f32.partialorder %v135, 0.0
      %vm176 = vcmp.gt.f32.partialorder %v136, 0.0
      %vm177 = vcmp.gt.f32.partialorder %v137, 0.0
      %vm178 = vcmp.gt.f32.partialorder %v138, 0.0
      %vm179 = vcmp.gt.f32.partialorder %v139, 0.0
      %vm180 = vcmp.gt.f32.partialorder %v140, 0.0
      %vm181 = vcmp.gt.f32.partialorder %v141, 0.0
      %vm182 = vcmp.gt.f32.partialorder %v142, 0.0
      %vm183 = vcmp.gt.f32.partialorder %v143, 0.0
      %vm184 = vcmp.gt.f32.partialorder %v144, 0.0
      %vm185 = vcmp.gt.f32.partialorder %v145, 0.0
      %vm186 = vcmp.gt.f32.partialorder %v146, 0.0
      %vm187 = vcmp.gt.f32.partialorder %v147, 0.0
      %vm188 = vcmp.gt.f32.partialorder %v148, 0.0
      %vm189 = vcmp.gt.f32.partialorder %v149, 0.0
      %vm190 = vcmp.gt.f32.partialorder %v150, 0.0
      %vm191 = vcmp.gt.f32.partialorder %v151, 0.0
      %vm192 = vcmp.gt.f32.partialorder %v152, 0.0
      %vm193 = vcmp.gt.f32.partialorder %v153, 0.0
      %vm194 = vcmp.gt.f32.partialorder %v154, 0.0
      %vm195 = vcmp.gt.f32.partialorder %v155, 0.0
      %vm196 = vcmp.gt.f32.partialorder %v156, 0.0
      %v197 = vsel %vm157, 1.0, 0.0
      %v198 = vsel %vm158, 1.0, 0.0
      %v199 = vsel %vm159, 1.0, 0.0
      %v200 = vsel %vm160, 1.0, 0.0
      %v201 = vsel %vm161, 1.0, 0.0
      %v202 = vsel %vm162, 1.0, 0.0
      %v203 = vsel %vm163, 1.0, 0.0
      %v204 = vsel %vm164, 1.0, 0.0
      %v205 = vsel %vm165, 1.0, 0.0
      %v206 = vsel %vm166, 1.0, 0.0
      %v207 = vsel %vm167, 1.0, 0.0
      %v208 = vsel %vm168, 1.0, 0.0
      %v209 = vsel %vm169, 1.0, 0.0
      %v210 = vsel %vm170, 1.0, 0.0
      %v211 = vsel %vm171, 1.0, 0.0
      %v212 = vsel %vm172, 1.0, 0.0
      %v213 = vsel %vm173, 1.0, 0.0
      %v214 = vsel %vm174, 1.0, 0.0
      %v215 = vsel %vm175, 1.0, 0.0
      %v216 = vsel %vm176, 1.0, 0.0
      %v217 = vsel %vm177, 1.0, 0.0
      %v218 = vsel %vm178, 1.0, 0.0
      %v219 = vsel %vm179, 1.0, 0.0
      %v220 = vsel %vm180, 1.0, 0.0
      %v221 = vsel %vm181, 1.0, 0.0
      %v222 = vsel %vm182, 1.0, 0.0
      %v223 = vsel %vm183, 1.0, 0.0
      %v224 = vsel %vm184, 1.0, 0.0
      %v225 = vsel %vm185, 1.0, 0.0
      %v226 = vsel %vm186, 1.0, 0.0
      %v227 = vsel %vm187, 1.0, 0.0
      %v228 = vsel %vm188, 1.0, 0.0
      %v229 = vsel %vm189, 1.0, 0.0
      %v230 = vsel %vm190, 1.0, 0.0
      %v231 = vsel %vm191, 1.0, 0.0
      %v232 = vsel %vm192, 1.0, 0.0
      %v233 = vsel %vm193, 1.0, 0.0
      %v234 = vsel %vm194, 1.0, 0.0
      %v235 = vsel %vm195, 1.0, 0.0
      %v236 = vsel %vm196, 1.0, 0.0
      %vm237 = vcmask 80896
      %v238 = vsel %vm237, %v197, -inf
      %v239 = vsel %vm237, %v217, -inf
      %v240 = vmax.f32 %v238, %v239
      %vm241 = vcmask 74752
      %v242 = vsel %vm241, %v198, -inf
      %v243 = vsel %vm241, %v218, -inf
      %v244 = vmax.f32 %v242, %v243
      %v245 = vsel %vm237, %v199, -inf
      %v246 = vsel %vm237, %v219, -inf
      %v247 = vmax.f32 %v245, %v246
      %v248 = vsel %vm241, %v200, -inf
      %v249 = vsel %vm241, %v220, -inf
      %v250 = vmax.f32 %v248, %v249
      %v251 = vsel %vm237, %v201, -inf
      %v252 = vsel %vm237, %v221, -inf
      %v253 = vmax.f32 %v251, %v252
      %v254 = vsel %vm241, %v202, -inf
      %v255 = vsel %vm241, %v222, -inf
      %v256 = vmax.f32 %v254, %v255
      %v257 = vsel %vm237, %v203, -inf
      %v258 = vsel %vm237, %v223, -inf
      %v259 = vmax.f32 %v257, %v258
      %v260 = vsel %vm241, %v204, -inf
      %v261 = vsel %vm241, %v224, -inf
      %v262 = vmax.f32 %v260, %v261
      %v263 = vsel %vm237, %v205, -inf
      %v264 = vsel %vm237, %v225, -inf
      %v265 = vmax.f32 %v263, %v264
      %v266 = vsel %vm241, %v206, -inf
      %v267 = vsel %vm241, %v226, -inf
      %v268 = vmax.f32 %v266, %v267
      %v269 = vsel %vm237, %v207, -inf
      %v270 = vsel %vm237, %v227, -inf
      %v271 = vmax.f32 %v269, %v270
      %v272 = vsel %vm241, %v208, -inf
      %v273 = vsel %vm241, %v228, -inf
      %v274 = vmax.f32 %v272, %v273
      %v275 = vsel %vm237, %v209, -inf
      %v276 = vsel %vm237, %v229, -inf
      %v277 = vmax.f32 %v275, %v276
      %v278 = vsel %vm241, %v210, -inf
      %v279 = vsel %vm241, %v230, -inf
      %v280 = vmax.f32 %v278, %v279
      %v281 = vsel %vm237, %v211, -inf
      %v282 = vsel %vm237, %v231, -inf
      %v283 = vmax.f32 %v281, %v282
      %v284 = vsel %vm241, %v212, -inf
      %v285 = vsel %vm241, %v232, -inf
      %v286 = vmax.f32 %v284, %v285
      %v287 = vsel %vm237, %v213, -inf
      %v288 = vsel %vm237, %v233, -inf
      %v289 = vmax.f32 %v287, %v288
      %v290 = vsel %vm241, %v214, -inf
      %v291 = vsel %vm241, %v234, -inf
      %v292 = vmax.f32 %v290, %v291
      %v293 = vsel %vm237, %v215, -inf
      %v294 = vsel %vm237, %v235, -inf
      %v295 = vmax.f32 %v293, %v294
      %v296 = vsel %vm241, %v216, -inf
      %v297 = vsel %vm241, %v236, -inf
      %v298 = vmax.f32 %v296, %v297
      %319 = vrot.lane.b32.xlu0 %v240, 127
      %v320 = vpop.permute.xlu0 %319
      %321 = vrot.lane.b32.xlu0 %v244, 127
      %v322 = vpop.permute.xlu0 %321
      %323 = vrot.lane.b32.xlu0 %v247, 127
      %v324 = vpop.permute.xlu0 %323
      %325 = vrot.lane.b32.xlu0 %v250, 127
      %v326 = vpop.permute.xlu0 %325
      %327 = vrot.lane.b32.xlu0 %v253, 127
      %v328 = vpop.permute.xlu0 %327
      %329 = vrot.lane.b32.xlu0 %v256, 127
      %v330 = vpop.permute.xlu0 %329
      %331 = vrot.lane.b32.xlu0 %v259, 127
      %v332 = vpop.permute.xlu0 %331
      %333 = vrot.lane.b32.xlu0 %v262, 127
      %v334 = vpop.permute.xlu0 %333
      %335 = vrot.lane.b32.xlu0 %v265, 127
      %v336 = vpop.permute.xlu0 %335
      %337 = vrot.lane.b32.xlu0 %v268, 127
      %v338 = vpop.permute.xlu0 %337
      %339 = vrot.lane.b32.xlu0 %v271, 127
      %v340 = vpop.permute.xlu0 %339
      %341 = vrot.lane.b32.xlu0 %v274, 127
      %v342 = vpop.permute.xlu0 %341
      %343 = vrot.lane.b32.xlu0 %v277, 127
      %v344 = vpop.permute.xlu0 %343
      %345 = vrot.lane.b32.xlu0 %v280, 127
      %v346 = vpop.permute.xlu0 %345
      %347 = vrot.lane.b32.xlu0 %v283, 127
      %v348 = vpop.permute.xlu0 %347
      %349 = vrot.lane.b32.xlu0 %v286, 127
      %v350 = vpop.permute.xlu0 %349
      %351 = vrot.lane.b32.xlu0 %v289, 127
      %v352 = vpop.permute.xlu0 %351
      %353 = vrot.lane.b32.xlu0 %v292, 127
      %v354 = vpop.permute.xlu0 %353
      %355 = vrot.lane.b32.xlu0 %v295, 127
      %v356 = vpop.permute.xlu0 %355
      %357 = vrot.lane.b32.xlu0 %v298, 127
      %v358 = vpop.permute.xlu0 %357
      %v379 = vadd.f32 %v240, %v320
      %v380 = vadd.f32 %v244, %v322
      %v381 = vadd.f32 %v247, %v324
      %v382 = vadd.f32 %v250, %v326
      %v383 = vadd.f32 %v253, %v328
      %v384 = vadd.f32 %v256, %v330
      %v385 = vadd.f32 %v259, %v332
      %v386 = vadd.f32 %v262, %v334
      %v387 = vadd.f32 %v265, %v336
      %v388 = vadd.f32 %v268, %v338
      %v389 = vadd.f32 %v271, %v340
      %v390 = vadd.f32 %v274, %v342
      %v391 = vadd.f32 %v277, %v344
      %v392 = vadd.f32 %v280, %v346
      %v393 = vadd.f32 %v283, %v348
      %v394 = vadd.f32 %v286, %v350
      %v395 = vadd.f32 %v289, %v352
      %v396 = vadd.f32 %v292, %v354
      %v397 = vadd.f32 %v295, %v356
      %v398 = vadd.f32 %v298, %v358
      %399 = vrot.lane.b32.xlu0 %v240, 126
      %v400 = vpop.permute.xlu0 %399
      %401 = vrot.lane.b32.xlu0 %v244, 126
      %v402 = vpop.permute.xlu0 %401
      %403 = vrot.lane.b32.xlu0 %v247, 126
      %v404 = vpop.permute.xlu0 %403
      %405 = vrot.lane.b32.xlu0 %v250, 126
      %v406 = vpop.permute.xlu0 %405
      %407 = vrot.lane.b32.xlu0 %v253, 126
      %v408 = vpop.permute.xlu0 %407
      %409 = vrot.lane.b32.xlu0 %v256, 126
      %v410 = vpop.permute.xlu0 %409
      %411 = vrot.lane.b32.xlu0 %v259, 126
      %v412 = vpop.permute.xlu0 %411
      %413 = vrot.lane.b32.xlu0 %v262, 126
      %v414 = vpop.permute.xlu0 %413
      %415 = vrot.lane.b32.xlu0 %v265, 126
      %v416 = vpop.permute.xlu0 %415
      %417 = vrot.lane.b32.xlu0 %v268, 126
      %v418 = vpop.permute.xlu0 %417
      %419 = vrot.lane.b32.xlu0 %v271, 126
      %v420 = vpop.permute.xlu0 %419
      %421 = vrot.lane.b32.xlu0 %v274, 126
      %v422 = vpop.permute.xlu0 %421
      %423 = vrot.lane.b32.xlu0 %v277, 126
      %v424 = vpop.permute.xlu0 %423
      %425 = vrot.lane.b32.xlu0 %v280, 126
      %v426 = vpop.permute.xlu0 %425
      %427 = vrot.lane.b32.xlu0 %v283, 126
      %v428 = vpop.permute.xlu0 %427
      %429 = vrot.lane.b32.xlu0 %v286, 126
      %v430 = vpop.permute.xlu0 %429
      %431 = vrot.lane.b32.xlu0 %v289, 126
      %v432 = vpop.permute.xlu0 %431
      %433 = vrot.lane.b32.xlu0 %v292, 126
      %v434 = vpop.permute.xlu0 %433
      %435 = vrot.lane.b32.xlu0 %v295, 126
      %v436 = vpop.permute.xlu0 %435
      %437 = vrot.lane.b32.xlu0 %v298, 126
      %v438 = vpop.permute.xlu0 %437
      %v459 = vadd.f32 %v379, %v400
      %v460 = vadd.f32 %v380, %v402
      %v461 = vadd.f32 %v381, %v404
      %v462 = vadd.f32 %v382, %v406
      %v463 = vadd.f32 %v383, %v408
      %v464 = vadd.f32 %v384, %v410
      %v465 = vadd.f32 %v385, %v412
      %v466 = vadd.f32 %v386, %v414
      %v467 = vadd.f32 %v387, %v416
      %v468 = vadd.f32 %v388, %v418
      %v469 = vadd.f32 %v389, %v420
      %v470 = vadd.f32 %v390, %v422
      %v471 = vadd.f32 %v391, %v424
      %v472 = vadd.f32 %v392, %v426
      %v473 = vadd.f32 %v393, %v428
      %v474 = vadd.f32 %v394, %v430
      %v475 = vadd.f32 %v395, %v432
      %v476 = vadd.f32 %v396, %v434
      %v477 = vadd.f32 %v397, %v436
      %v478 = vadd.f32 %v398, %v438
      %vm499 = vcmask 1046528
      %v500 = vrot.slane %v459, 1
      %v501 = vrot.slane %v460, 1
      %v502 = vsel %vm499, %v500, %v501
      %v503 = vrot.slane %v461, 1
      %v504 = vrot.slane %v462, 1
      %v505 = vsel %vm499, %v503, %v504
      %v506 = vrot.slane %v463, 1
      %v507 = vrot.slane %v464, 1
      %v508 = vsel %vm499, %v506, %v507
      %v509 = vrot.slane %v465, 1
      %v510 = vrot.slane %v466, 1
      %v511 = vsel %vm499, %v509, %v510
      %v512 = vrot.slane %v467, 1
      %v513 = vrot.slane %v468, 1
      %v514 = vsel %vm499, %v512, %v513
      %v515 = vrot.slane %v469, 1
      %v516 = vrot.slane %v470, 1
      %v517 = vsel %vm499, %v515, %v516
      %v518 = vrot.slane %v471, 1
      %v519 = vrot.slane %v472, 1
      %v520 = vsel %vm499, %v518, %v519
      %v521 = vrot.slane %v473, 1
      %v522 = vrot.slane %v474, 1
      %v523 = vsel %vm499, %v521, %v522
      %v524 = vrot.slane %v475, 1
      %v525 = vrot.slane %v476, 1
      %v526 = vsel %vm499, %v524, %v525
      %v527 = vrot.slane %v477, 1
      %v528 = vrot.slane %v478, 1
      %v529 = vsel %vm499, %v527, %v528
      %v540 = vadd.f32 %v459, %v502
      %v541 = vadd.f32 %v461, %v505
      %v542 = vadd.f32 %v463, %v508
      %v543 = vadd.f32 %v465, %v511
      %v544 = vadd.f32 %v467, %v514
      %v545 = vadd.f32 %v469, %v517
      %v546 = vadd.f32 %v471, %v520
      %v547 = vadd.f32 %v473, %v523
      %v548 = vadd.f32 %v475, %v526
      %v549 = vadd.f32 %v477, %v529
      %vm550 = vcmask 1045504
      %v551 = vrot.slane %v459, 2
      %v552 = vrot.slane %v460, 2
      %v553 = vsel %vm550, %v551, %v552
      %v554 = vrot.slane %v461, 2
      %v555 = vrot.slane %v462, 2
      %v556 = vsel %vm550, %v554, %v555
      %v557 = vrot.slane %v463, 2
      %v558 = vrot.slane %v464, 2
      %v559 = vsel %vm550, %v557, %v558
      %v560 = vrot.slane %v465, 2
      %v561 = vrot.slane %v466, 2
      %v562 = vsel %vm550, %v560, %v561
      %v563 = vrot.slane %v467, 2
      %v564 = vrot.slane %v468, 2
      %v565 = vsel %vm550, %v563, %v564
      %v566 = vrot.slane %v469, 2
      %v567 = vrot.slane %v470, 2
      %v568 = vsel %vm550, %v566, %v567
      %v569 = vrot.slane %v471, 2
      %v570 = vrot.slane %v472, 2
      %v571 = vsel %vm550, %v569, %v570
      %v572 = vrot.slane %v473, 2
      %v573 = vrot.slane %v474, 2
      %v574 = vsel %vm550, %v572, %v573
      %v575 = vrot.slane %v475, 2
      %v576 = vrot.slane %v476, 2
      %v577 = vsel %vm550, %v575, %v576
      %v578 = vrot.slane %v477, 2
      %v579 = vrot.slane %v478, 2
      %v580 = vsel %vm550, %v578, %v579
      %v591 = vadd.f32 %v540, %v553
      %v592 = vadd.f32 %v541, %v556
      %v593 = vadd.f32 %v542, %v559
      %v594 = vadd.f32 %v543, %v562
      %v595 = vadd.f32 %v544, %v565
      %v596 = vadd.f32 %v545, %v568
      %v597 = vadd.f32 %v546, %v571
      %v598 = vadd.f32 %v547, %v574
      %v599 = vadd.f32 %v548, %v577
      %v600 = vadd.f32 %v549, %v580
      %v601 = vadd.f32 %v591, %v592
      %v602 = vadd.f32 %v592, %v593
      %v603 = vadd.f32 %v593, %v594
      %v604 = vadd.f32 %v594, %v595
      %v605 = vadd.f32 %v595, %v596
      %v606 = vadd.f32 %v596, %v597
      %v607 = vadd.f32 %v597, %v598
      %v608 = vadd.f32 %v598, %v599
      %v609 = vadd.f32 %v601, %v593
      %v610 = vadd.f32 %v602, %v594
      %v611 = vadd.f32 %v603, %v595
      %v612 = vadd.f32 %v604, %v596
      %v613 = vadd.f32 %v605, %v597
      %v614 = vadd.f32 %v606, %v598
      %v615 = vadd.f32 %v607, %v599
      %v616 = vadd.f32 %v608, %v600
      %vm617 = vcmp.gt.f32.partialorder %v609, 0.0
      %vm618 = vcmp.gt.f32.partialorder %v610, 0.0
      %vm619 = vcmp.gt.f32.partialorder %v611, 0.0
      %vm620 = vcmp.gt.f32.partialorder %v612, 0.0
      %vm621 = vcmp.gt.f32.partialorder %v613, 0.0
      %vm622 = vcmp.gt.f32.partialorder %v614, 0.0
      %vm623 = vcmp.gt.f32.partialorder %v615, 0.0
      %vm624 = vcmp.gt.f32.partialorder %v616, 0.0
      %vm625 = vcmp.eq.f32.partialorder %v247, 0.0
      %vm626 = vcmp.eq.f32.partialorder %v250, 0.0
      %vm627 = vcmp.eq.f32.partialorder %v253, 0.0
      %vm628 = vcmp.eq.f32.partialorder %v256, 0.0
      %vm629 = vcmp.eq.f32.partialorder %v259, 0.0
      %vm630 = vcmp.eq.f32.partialorder %v262, 0.0
      %vm631 = vcmp.eq.f32.partialorder %v265, 0.0
      %vm632 = vcmp.eq.f32.partialorder %v268, 0.0
      %vm633 = vcmp.eq.f32.partialorder %v271, 0.0
      %vm634 = vcmp.eq.f32.partialorder %v274, 0.0
      %vm635 = vcmp.eq.f32.partialorder %v277, 0.0
      %vm636 = vcmp.eq.f32.partialorder %v280, 0.0
      %vm637 = vcmp.eq.f32.partialorder %v283, 0.0
      %vm638 = vcmp.eq.f32.partialorder %v286, 0.0
      %vm639 = vcmp.eq.f32.partialorder %v289, 0.0
      %vm640 = vcmp.eq.f32.partialorder %v292, 0.0
      %v641 = vsel %vm625, 1, 0
      %v642 = vsel %vm626, 1, 0
      %v643 = vsel %vm627, 1, 0
      %v644 = vsel %vm628, 1, 0
      %v645 = vsel %vm629, 1, 0
      %v646 = vsel %vm630, 1, 0
      %v647 = vsel %vm631, 1, 0
      %v648 = vsel %vm632, 1, 0
      %v649 = vsel %vm633, 1, 0
      %v650 = vsel %vm634, 1, 0
      %v651 = vsel %vm635, 1, 0
      %v652 = vsel %vm636, 1, 0
      %v653 = vsel %vm637, 1, 0
      %v654 = vsel %vm638, 1, 0
      %v655 = vsel %vm639, 1, 0
      %v656 = vsel %vm640, 1, 0
      %v657 = vrot.slane %v641, 1
      %v658 = vrot.slane %v642, 1
      %v659 = vsel %vm499, %v657, %v658
      %v660 = vrot.slane %v643, 1
      %v661 = vrot.slane %v644, 1
      %v662 = vsel %vm499, %v660, %v661
      %v663 = vrot.slane %v645, 1
      %v664 = vrot.slane %v646, 1
      %v665 = vsel %vm499, %v663, %v664
      %v666 = vrot.slane %v647, 1
      %v667 = vrot.slane %v648, 1
      %v668 = vsel %vm499, %v666, %v667
      %v669 = vrot.slane %v649, 1
      %v670 = vrot.slane %v650, 1
      %v671 = vsel %vm499, %v669, %v670
      %v672 = vrot.slane %v651, 1
      %v673 = vrot.slane %v652, 1
      %v674 = vsel %vm499, %v672, %v673
      %v675 = vrot.slane %v653, 1
      %v676 = vrot.slane %v654, 1
      %v677 = vsel %vm499, %v675, %v676
      %v678 = vrot.slane %v655, 1
      %v679 = vrot.slane %v656, 1
      %v680 = vsel %vm499, %v678, %v679
      %681 = vrot.lane.b32.xlu0 %v659, 127
      %v682 = vpop.permute.xlu0 %681
      %683 = vrot.lane.b32.xlu0 %v662, 127
      %v684 = vpop.permute.xlu0 %683
      %685 = vrot.lane.b32.xlu0 %v665, 127
      %v686 = vpop.permute.xlu0 %685
      %687 = vrot.lane.b32.xlu0 %v668, 127
      %v688 = vpop.permute.xlu0 %687
      %689 = vrot.lane.b32.xlu0 %v671, 127
      %v690 = vpop.permute.xlu0 %689
      %691 = vrot.lane.b32.xlu0 %v674, 127
      %v692 = vpop.permute.xlu0 %691
      %693 = vrot.lane.b32.xlu0 %v677, 127
      %v694 = vpop.permute.xlu0 %693
      %695 = vrot.lane.b32.xlu0 %v680, 127
      %v696 = vpop.permute.xlu0 %695
      %vm697 = vcmp.ne.s32.totalorder %v682, 0
      %vm698 = vcmp.ne.s32.totalorder %v684, 0
      %vm699 = vcmp.ne.s32.totalorder %v686, 0
      %vm700 = vcmp.ne.s32.totalorder %v688, 0
      %vm701 = vcmp.ne.s32.totalorder %v690, 0
      %vm702 = vcmp.ne.s32.totalorder %v692, 0
      %vm703 = vcmp.ne.s32.totalorder %v694, 0
      %vm704 = vcmp.ne.s32.totalorder %v696, 0
      %vm705 = vmand %vm617, %vm697
      %vm706 = vmand %vm618, %vm698
      %vm707 = vmand %vm619, %vm699
      %vm708 = vmand %vm620, %vm700
      %vm709 = vmand %vm621, %vm701
      %vm710 = vmand %vm622, %vm702
      %vm711 = vmand %vm623, %vm703
      %vm712 = vmand %vm624, %vm704
      %v713 = vsel %vm705, 1, 0
      %v714 = vsel %vm706, 1, 0
      %v715 = vsel %vm707, 1, 0
      %v716 = vsel %vm708, 1, 0
      %v717 = vsel %vm709, 1, 0
      %v718 = vsel %vm710, 1, 0
      %v719 = vsel %vm711, 1, 0
      %v720 = vsel %vm712, 1, 0
      %v721 = vcvt.s32.f32 %v713
      %v722 = vcvt.s32.f32 %v714
      %v723 = vcvt.s32.f32 %v715
      %v724 = vcvt.s32.f32 %v716
      %v725 = vcvt.s32.f32 %v717
      %v726 = vcvt.s32.f32 %v718
      %v727 = vcvt.s32.f32 %v719
      %v728 = vcvt.s32.f32 %v720
      %vm729 = vcmask 64512
      %730 = vst.msk [vmem:[%s116] sm:$0xff] %vm729, %v721
      %731 = vst.msk [vmem:[%s116 + $0x8] sm:$0xff] %vm729, %v722
      %732 = vst.msk [vmem:[%s116 + $0x10] sm:$0xff] %vm729, %v723
      %733 = vst.msk [vmem:[%s116 + $0x18] sm:$0xff] %vm729, %v724
      %734 = vst.msk [vmem:[%s116 + $0x20] sm:$0xff] %vm729, %v725
      %735 = vst.msk [vmem:[%s116 + $0x28] sm:$0xff] %vm729, %v726
      %736 = vst.msk [vmem:[%s116 + $0x30] sm:$0xff] %vm729, %v727
      %737 = vst.msk [vmem:[%s116 + $0x38] sm:$0xff] %vm729, %v728
      %p738 = scmp.lt.s32.totalorder %s12, 1
      %s739 = scalar_select %p738, %s12, 1
      %s740 = smul.addr %s739, 8
      %s741 = smul.addr %s740, 8
      %s742 = scalar_lea.vmem %s1, %s741
      // Predicated region
      $region25: #{hausdorff_distance.3} parent=23 // pred_check
        %p743 = pneg %p56
      $region26: #{hausdorff_distance.3} parent=23 // pred_check_branch
        %745 = sbr.rel (%p743) target = $region28
      $region27: #{hausdorff_distance.3} parent=23 // pred_region
        _
      $region28: #{hausdorff_distance.3} parent=23 // pred_fallthru
        _
    $region24: #{hausdorff_distance.3} parent=5 // pred_fallthru
      _
    %p746 = scmp.le.s32.totalorder 2, %s7
    // Predicated region
    $region29: #{hausdorff_distance.3} parent=5 // pred_check
      %p747 = pneg %p746
    $region30: #{hausdorff_distance.3} parent=5 // pred_check_branch
      %749 = sbr.rel (%p747) target = $region32
    $region31: #{hausdorff_distance.3} parent=5 // pred_region
      %s750 = ssub.s32 %s7, 2
      // Predicated region
      $region33: #{hausdorff_distance.3} parent=31 // pred_check
        %p751 = pneg %p62
      $region34: #{hausdorff_distance.3} parent=31 // pred_check_branch
        %753 = sbr.rel (%p751) target = $region36
      $region35: #{hausdorff_distance.3} parent=31 // pred_region
        %p754 = scmp.lt.s32.totalorder %s13, 1
        %s755 = scalar_select %p754, %s13, 1
        %s756 = smul.addr %s755, 8
        %s757 = smul.addr %s756, 8
        %s758 = scalar_lea.vmem %s1, %s757
      $region36: #{hausdorff_distance.3} parent=31 // pred_fallthru
        _
    $region32: #{hausdorff_distance.3} parent=5 // pred_fallthru
      _
  $region6: #{hausdorff_distance.3} parent=0 // loop_footer
    %s11 = sadd.s32 1, %s7
  $region7: #{hausdorff_distance.3} parent=0 // loop_footer_branch
    %6 = sbr.rel target = $region3
  $region8: #{hausdorff_distance.3} parent=0 // loop_exit
    _

// kernel: hausdorff_distance.5
$region0: #{hausdorff_distance.5}
  #allocation0 [shape = 'u32[]', space=smem, size = 0x4, offset = 0x4, fixed_abs, tag = 'smem constant byte address 0x4 - core index']
  #allocation1 [shape = 'u32[144,128]{1,0:T(1,128)}', space=vmem, size = 0x12000, scoped, tag = 'internal scratch']
  #allocation2 [shape = 'f32[2,128]{1,0:T(2,128)}', space=vmem, size = 0x400, scoped, tag = 'scratch operand']
  #allocation3 [shape = 's32[1]{0}', space=sflag, size = 0x4, scoped, tag = 'scoped memory for hausdorff_distance.5']
  #allocation4 [shape = 'u8[512]{0}', space=smem, size = 0x200, scoped, tag = 'prefetched SMEM operand 0']
  %s0 = inlined_call_operand.vmem [shape: s32[8], index: 0, kind: input, shape index: {}]
  %s1 = inlined_call_operand.vmem [shape: f32[2,512,8], index: 1, kind: input, shape index: {}]
  %s2 = inlined_call_operand.vmem [shape: f32[2,8,512], index: 2, kind: input, shape index: {}]
  %s3 = inlined_call_operand.vmem [shape: f32[2,2,512], index: 3, kind: output, shape index: {}]
  %s4 = sld [smem:[#allocation0]]
  $region53: #{hausdorff_distance.5} parent=0
    _
  %s6 = ssub.s32 1, %s4
  %s7 = scalar_select 0, %s6, %s4
  %s8 = sshll.u32 %s0, 4
  %s9 = int_to_ptr.vmem [resolvable:$true] %s8
  %11 = dma.vmem_to_smem %s9, 16, [#allocation4], [#allocation3]
  %12 = dma.done [#allocation3], 16
  %13 = sfence
  loop: start=0, step=1, limit=34
  $region2: #{hausdorff_distance.5} parent=0 // loop_pre_header
    _
  $region3: #{hausdorff_distance.5} parent=0 // loop_header
    %s15 = sphi 0, %s19
    %p16 = scmp.ge.s32.totalorder %s15, 34
    %s22 = sphi 0, %s41
    %s23 = sphi 0, %s37
    %s24 = sphi 0, %s33
    %s25 = sphi 0, %s22
    %s26 = sphi 0, %s23
    %s27 = sphi 0, %s24
    %s28 = sphi 0, %s25
    %s29 = sphi 0, %s26
    %s30 = sphi 0, %s27
    %s46 = sphi 0, %s48
    %s49 = sphi 0, %s46
    %s50 = sphi 0, %s49
    %s66 = sphi 0, %s50
    %s74 = sphi 0, %s76
    %s77 = sphi 0, %s74
    %s78 = sphi 0, %s77
    %s94 = sphi 0, %s78
    %s102 = sphi 0, %s104
    %s105 = sphi 0, %s102
    %s106 = sphi 0, %s105
    %s122 = sphi 0, %s106
  $region4: #{hausdorff_distance.5} parent=0 // loop_header_branch
    %18 = sbr.rel (%p16) target = $region8
  $region5: #{hausdorff_distance.5} parent=0 // loop_body
    %s20 = ssub.s32 %s15, 1
    %s21 = ssub.s32 %s15, 2
    %s31 = sadd.s32 1, %s24
    %p32 = scmp.ge.s32.totalorder %s31, 4
    %s33 = scalar_select %p32, 0, %s31
    %s34 = sadd.s32 1, %s23
    %s35 = scalar_select %p32, %s34, %s23
    %p36 = scmp.ge.s32.totalorder %s35, 4
    %s37 = scalar_select %p36, 0, %s35
    %s38 = sadd.s32 1, %s22
    %s39 = scalar_select %p36, %s38, %s22
    %p40 = scmp.ge.s32.totalorder %s39, 2
    %s41 = scalar_select %p40, 0, %s39
    %s42 = ssub.s32 %s22, %s41
    %s43 = ssub.s32 %s24, %s33
    %s44 = sor.u32 %s42, %s43
    %p45 = scmp.eq.s32.totalorder %s44, 0
    %s47 = sadd.s32 %s46, 1
    %s48 = scalar_select %p45, %s46, %s47
    %p51 = pneg %p45
    %p52 = scmp.eq.s32.totalorder %s15, 31
    %p53 = por %p51, %p52
    %p54 = scmp.ne.s32.totalorder %s46, %s49
    %p55 = scmp.eq.s32.totalorder %s15, 0
    %p56 = por %p54, %p55
    %p57 = scmp.ne.s32.totalorder %s46, %s49
    %p58 = scmp.eq.s32.totalorder %s20, 31
    %p59 = por %p57, %p58
    %p60 = scmp.ne.s32.totalorder %s49, %s50
    %p61 = scmp.eq.s32.totalorder %s20, 0
    %p62 = por %p60, %p61
    %p63 = scmp.ne.s32.totalorder %s49, %s50
    %p64 = scmp.eq.s32.totalorder %s21, 31
    %p65 = por %p63, %p64
    %p67 = scmp.ne.s32.totalorder %s50, %s66
    %p68 = scmp.eq.s32.totalorder %s21, 0
    %p69 = por %p67, %p68
    %s70 = ssub.s32 %s22, %s41
    %s71 = ssub.s32 %s23, %s37
    %s72 = sor.u32 %s70, %s71
    %p73 = scmp.eq.s32.totalorder %s72, 0
    %s75 = sadd.s32 %s74, 1
    %s76 = scalar_select %p73, %s74, %s75
    %p79 = pneg %p73
    %p80 = scmp.eq.s32.totalorder %s15, 31
    %p81 = por %p79, %p80
    %p82 = scmp.ne.s32.totalorder %s74, %s77
    %p83 = scmp.eq.s32.totalorder %s15, 0
    %p84 = por %p82, %p83
    %p85 = scmp.ne.s32.totalorder %s74, %s77
    %p86 = scmp.eq.s32.totalorder %s20, 31
    %p87 = por %p85, %p86
    %p88 = scmp.ne.s32.totalorder %s77, %s78
    %p89 = scmp.eq.s32.totalorder %s20, 0
    %p90 = por %p88, %p89
    %p91 = scmp.ne.s32.totalorder %s77, %s78
    %p92 = scmp.eq.s32.totalorder %s21, 31
    %p93 = por %p91, %p92
    %p95 = scmp.ne.s32.totalorder %s78, %s94
    %p96 = scmp.eq.s32.totalorder %s21, 0
    %p97 = por %p95, %p96
    %s98 = ssub.s32 %s22, %s41
    %s99 = ssub.s32 %s23, %s37
    %s100 = sor.u32 %s98, %s99
    %p101 = scmp.eq.s32.totalorder %s100, 0
    %s103 = sadd.s32 %s102, 1
    %s104 = scalar_select %p101, %s102, %s103
    %p107 = pneg %p101
    %p108 = scmp.eq.s32.totalorder %s15, 31
    %p109 = por %p107, %p108
    %p110 = scmp.ne.s32.totalorder %s102, %s105
    %p111 = scmp.eq.s32.totalorder %s15, 0
    %p112 = por %p110, %p111
    %p113 = scmp.ne.s32.totalorder %s102, %s105
    %p114 = scmp.eq.s32.totalorder %s20, 31
    %p115 = por %p113, %p114
    %p116 = scmp.ne.s32.totalorder %s105, %s106
    %p117 = scmp.eq.s32.totalorder %s20, 0
    %p118 = por %p116, %p117
    %p119 = scmp.ne.s32.totalorder %s105, %s106
    %p120 = scmp.eq.s32.totalorder %s21, 31
    %p121 = por %p119, %p120
    %p123 = scmp.ne.s32.totalorder %s106, %s122
    %p124 = scmp.eq.s32.totalorder %s21, 0
    %p125 = por %p123, %p124
    %p126 = scmp.le.s32.totalorder 1, %s15
    %p127 = scmp.lt.s32.totalorder %s15, 33
    %p128 = pnand %p126, %p127
    %p129 = pneg %p128
    // Predicated region
    $region9: #{hausdorff_distance.5} parent=5 // pred_check
      _
    $region10: #{hausdorff_distance.5} parent=5 // pred_check_branch
      %131 = sbr.rel (%p128) target = $region12
    $region11: #{hausdorff_distance.5} parent=5 // pred_region
      %s132 = ssub.s32 %s15, 1
    $region12: #{hausdorff_distance.5} parent=5 // pred_fallthru
      _
    %p133 = scmp.lt.s32.totalorder %s15, 32
    // Predicated region
    $region13: #{hausdorff_distance.5} parent=5 // pred_check
      %p134 = pneg %p133
    $region14: #{hausdorff_distance.5} parent=5 // pred_check_branch
      %136 = sbr.rel (%p134) target = $region16
    $region15: #{hausdorff_distance.5} parent=5 // pred_region
      // Predicated region
      $region17: #{hausdorff_distance.5} parent=15 // pred_check
        %p137 = pneg %p56
      $region18: #{hausdorff_distance.5} parent=15 // pred_check_branch
        %139 = sbr.rel (%p137) target = $region20
      $region19: #{hausdorff_distance.5} parent=15 // pred_region
        %s140 = smul.u32 16, %s24
        %p141 = scmp.lt.s32.totalorder %s22, 1
        %s142 = scalar_select %p141, %s22, 1
        %p143 = scmp.lt.s32.totalorder %s140, 63
        %s144 = scalar_select %p143, %s140, 63
        %s145 = smul.addr %s142, 64
        %s146 = sadd.s32 %s144, %s145
        %s147 = smul.addr %s146, 8
        %s148 = scalar_lea.vmem %s1, %s147
        %s149 = smul.u32 16, %s24
      $region20: #{hausdorff_distance.5} parent=15 // pred_fallthru
        _
      // Predicated region
      $region21: #{hausdorff_distance.5} parent=15 // pred_check
        %p150 = pneg %p84
      $region22: #{hausdorff_distance.5} parent=15 // pred_check_branch
        %152 = sbr.rel (%p150) target = $region24
      $region23: #{hausdorff_distance.5} parent=15 // pred_region
        %p153 = scmp.lt.s32.totalorder %s22, 1
        %s154 = scalar_select %p153, %s22, 1
        %p155 = scmp.lt.s32.totalorder %s23, 3
        %s156 = scalar_select %p155, %s23, 3
        %s157 = smul.addr %s154, 4
        %s158 = sadd.s32 %s156, %s157
        %s159 = smul.addr %s158, 8
        %s160 = scalar_lea.vmem %s2, %s159
      $region24: #{hausdorff_distance.5} parent=15 // pred_fallthru
        _
    $region16: #{hausdorff_distance.5} parent=5 // pred_fallthru
      _
    %p161 = scmp.le.s32.totalorder 1, %s15
    %p162 = scmp.lt.s32.totalorder %s15, 33
    %p163 = pnand %p161, %p162
    %p164 = pneg %p163
    // Predicated region
    $region25: #{hausdorff_distance.5} parent=5 // pred_check
      _
    $region26: #{hausdorff_distance.5} parent=5 // pred_check_branch
      %166 = sbr.rel (%p163) target = $region28
    $region27: #{hausdorff_distance.5} parent=5 // pred_region
      %s167 = ssub.s32 %s15, 1
      %s168 = smul.u32 16, %s27
      %p169 = scmp.lt.s32.totalorder %s25, 1
      %s170 = scalar_select %p169, %s25, 1
      %p171 = scmp.lt.s32.totalorder %s168, 63
      %s172 = scalar_select %p171, %s168, 63
      %s173 = smul.addr %s170, 64
      %s174 = sadd.s32 %s172, %s173
      %s175 = smul.addr %s174, 8
      %s176 = scalar_lea.vmem %s1, %s175
      %p177 = pneg %p62
      %p178 = pneg %p59
      %p179 = scmp.lt.s32.totalorder %s25, 1
      %s180 = scalar_select %p179, %s25, 1
      %p181 = scmp.lt.s32.totalorder %s26, 3
      %s182 = scalar_select %p181, %s26, 3
      %s183 = smul.addr %s180, 4
      %s184 = sadd.s32 %s182, %s183
      %s185 = smul.addr %s184, 8
      %s186 = scalar_lea.vmem %s2, %s185
      %p187 = pneg %p90
      %p188 = pneg %p87
      %p189 = pneg %p118
      %p190 = pneg %p115
      %p191 = scmp.lt.s32.totalorder %s25, 1
      %s192 = scalar_select %p191, %s25, 1
      %p193 = scmp.lt.s32.totalorder %s26, 3
      %s194 = scalar_select %p193, %s26, 3
      %s195 = smul.addr %s192, 4
      %s196 = sadd.s32 %s194, %s195
      %s197 = smul.addr %s196, 2
      %s198 = scalar_lea.vmem %s3, %s197
      %s199 = smul.u32 16, %s27
      %p200 = scmp.lt.s32.totalorder %s25, 1
      %s201 = scalar_select %p200, %s25, 1
      %p202 = scmp.lt.s32.totalorder %s199, 63
      %s203 = scalar_select %p202, %s199, 63
      %s204 = smul.addr %s201, 64
      %s205 = sadd.s32 %s203, %s204
      %s206 = smul.addr %s205, 8
      %s207 = scalar_lea.vmem %s1, %s206
      %s208 = smul.u32 16, %s27
      %p209 = scmp.lt.s32.totalorder %s25, 1
      %s210 = scalar_select %p209, %s25, 1
      %p211 = scmp.lt.s32.totalorder %s26, 3
      %s212 = scalar_select %p211, %s26, 3
      %s213 = smul.addr %s210, 4
      %s214 = sadd.s32 %s212, %s213
      %s215 = smul.addr %s214, 8
      %s216 = scalar_lea.vmem %s2, %s215
      %p217 = scmp.lt.s32.totalorder %s25, 1
      %s218 = scalar_select %p217, %s25, 1
      %p219 = scmp.lt.s32.totalorder %s26, 3
      %s220 = scalar_select %p219, %s26, 3
      %s221 = smul.addr %s218, 4
      %s222 = sadd.s32 %s220, %s221
      %s223 = smul.addr %s222, 2
      %s224 = scalar_lea.vmem %s3, %s223
      %p225 = scmp.eq.s32.totalorder %s27, 0
      // Predicated region
      $region29: #{hausdorff_distance.5} parent=27 // pred_check
        %p226 = pneg %p225
      $region30: #{hausdorff_distance.5} parent=27 // pred_check_branch
        %228 = sbr.rel (%p226) target = $region32
      $region31: #{hausdorff_distance.5} parent=27 // pred_region
        %229 = vst [vmem:[#allocation2] sm:$0x3] inf
      $region32: #{hausdorff_distance.5} parent=27 // pred_fallthru
        _
      %s230 = smul.u32 %s25, 4
      %s231 = sadd.s32 %s230, %s27
      %s232 = sld [smem:[#allocation4 + %s231]]
      %s233 = sadd.s32 %s230, %s26
      %s234 = sld [smem:[#allocation4 + %s233]]
      %p235 = scmp.gt.s32.totalorder %s232, 0
      %p236 = scmp.gt.s32.totalorder %s234, 0
      %p237 = pnand %p235, %p236
      %p238 = pneg %p237
      // Predicated region
      $region33: #{hausdorff_distance.5} parent=27 // pred_check
        _
      $region34: #{hausdorff_distance.5} parent=27 // pred_check_branch
        %240 = sbr.rel (%p237) target = $region36
      $region35: #{hausdorff_distance.5} parent=27 // pred_region
        %v241 = vld [vmem:[%s207] sm:$0xff]
        %v242 = vld [vmem:[%s207 + $0x8] sm:$0xff]
        %v243 = vld [vmem:[%s207 + $0x10] sm:$0xff]
        %v244 = vld [vmem:[%s207 + $0x18] sm:$0xff]
        %v245 = vld [vmem:[%s207 + $0x20] sm:$0xff]
        %v246 = vld [vmem:[%s207 + $0x28] sm:$0xff]
        %v247 = vld [vmem:[%s207 + $0x30] sm:$0xff]
        %v248 = vld [vmem:[%s207 + $0x38] sm:$0xff]
        %v249 = vld [vmem:[%s207 + $0x40] sm:$0xff]
        %v250 = vld [vmem:[%s207 + $0x48] sm:$0xff]
        %v251 = vld [vmem:[%s207 + $0x50] sm:$0xff]
        %v252 = vld [vmem:[%s207 + $0x58] sm:$0xff]
        %v253 = vld [vmem:[%s207 + $0x60] sm:$0xff]
        %v254 = vld [vmem:[%s207 + $0x68] sm:$0xff]
        %v255 = vld [vmem:[%s207 + $0x70] sm:$0xff]
        %v256 = vld [vmem:[%s207 + $0x78] sm:$0xff]
        %v257 = vld [vmem:[%s216] sm:$0xff]
        %vm258 = vcmask 64512
        %v260 = vsel %vm258, %v241, 0
        %v263 = vsel %vm258, %v242, 0
        %v266 = vsel %vm258, %v243, 0
        %v269 = vsel %vm258, %v244, 0
        %v272 = vsel %vm258, %v245, 0
        %v275 = vsel %vm258, %v246, 0
        %v278 = vsel %vm258, %v247, 0
        %v281 = vsel %vm258, %v248, 0
        %v284 = vsel %vm258, %v249, 0
        %v287 = vsel %vm258, %v250, 0
        %v290 = vsel %vm258, %v251, 0
        %v293 = vsel %vm258, %v252, 0
        %v296 = vsel %vm258, %v253, 0
        %v299 = vsel %vm258, %v254, 0
        %v302 = vsel %vm258, %v255, 0
        %v305 = vsel %vm258, %v256, 0
        %307 = vmatprep.subr.mxu0 0.0
        %308 = vmatpush1.msra.mxu0 %v257
        %309 = vmatprep.subr.mxu0 0.0
        %310 = vmatpush1.msra.mxu0 0.0
        %311 = vmatprep.subr.mxu0 0.0
        %312 = vmatpush1.msra.mxu0 0.0
        %313 = vmatprep.subr.mxu0 0.0
        %314 = vmatpush1.msra.mxu0 0.0
        %315 = vmatprep.subr.mxu0 0.0
        %316 = vmatpush1.msra.mxu0 0.0
        %317 = vmatprep.subr.mxu0 0.0
        %318 = vmatpush1.msra.mxu0 0.0
        %319 = vmatprep.subr.mxu0 0.0
        %320 = vmatpush1.msra.mxu0 0.0
        %321 = vmatprep.subr.mxu0 0.0
        %322 = vmatpush1.msra.mxu0 0.0
        %323 = vmatprep.subr.mxu0 0.0
        %324 = vmatpush1.msra.mxu0 0.0
        %325 = vmatprep.subr.mxu0 0.0
        %326 = vmatpush1.msra.mxu0 0.0
        %327 = vmatprep.subr.mxu0 0.0
        %328 = vmatpush1.msra.mxu0 0.0
        %329 = vmatprep.subr.mxu0 0.0
        %330 = vmatpush1.msra.mxu0 0.0
        %331 = vmatprep.subr.mxu0 0.0
        %332 = vmatpush1.msra.mxu0 0.0
        %333 = vmatprep.subr.mxu0 0.0
        %334 = vmatpush1.msra.mxu0 0.0
        %335 = vmatprep.subr.mxu0 0.0
        %336 = vmatpush1.msra.mxu0 0.0
        %337 = vmatprep.subr.mxu0 0.0
        %338 = vmatpush1.msra.mxu0 0.0
        %339 = vmatprep.subr.mxu0 0.0
        %340 = vmatpush1.msra.mxu0 0.0
        %341 = vmatprep.subr.mxu0 0.0
        %342 = vmatpush1.msra.mxu0 0.0
        %343 = vmatprep.subr.mxu0 0.0
        %344 = vmatpush1.msra.mxu0 0.0
        %345 = vmatprep.subr.mxu0 0.0
        %346 = vmatpush1.msra.mxu0 0.0
        %347 = vmatprep.subr.mxu0 0.0
        %348 = vmatpush1.msra.mxu0 0.0
        %349 = vmatprep.subr.mxu0 0.0
        %350 = vmatpush1.msra.mxu0 0.0
        %351 = vmatprep.subr.mxu0 0.0
        %352 = vmatpush1.msra.mxu0 0.0
        %353 = vmatprep.subr.mxu0 0.0
        %354 = vmatpush1.msra.mxu0 0.0
        %355 = vmatprep.subr.mxu0 0.0
        %356 = vmatpush1.msra.mxu0 0.0
        %357 = vmatprep.subr.mxu0 0.0
        %358 = vmatpush1.msra.mxu0 0.0
        %359 = vmatprep.subr.mxu0 0.0
        %360 = vmatpush1.msra.mxu0 0.0
        %361 = vmatprep.subr.mxu0 0.0
        %362 = vmatpush1.msra.mxu0 0.0
        %363 = vmatprep.subr.mxu0 0.0
        %364 = vmatpush1.msra.mxu0 0.0
        %365 = vmatprep.subr.mxu0 0.0
        %366 = vmatpush1.msra.mxu0 0.0
        %367 = vmatprep.subr.mxu0 0.0
        %368 = vmatpush1.msra.mxu0 0.0
        %369 = vmatprep.subr.mxu0 0.0
        %370 = vmatpush1.msra.mxu0 0.0
        %371 = vmatprep.mubr.f32.mxu0 0.0
        %372 = vmatmul.mubr.f32.gmra.mrb[0].mxu0 %v260
        %v373 = vpop.f32.mrb[0].mxu0
        %v374 = vadd.f32 0.0, %v373
        %v375 = vpop.f32.mrb[0].mxu0
        %376 = vmatprep.mubr.f32.mxu0 0.0
        %377 = vmatmul.mubr.f32.gmra.mrb[0].mxu0 %v263
        %v378 = vpop.f32.mrb[0].mxu0
        %v379 = vadd.f32 0.0, %v378
        %v380 = vpop.f32.mrb[0].mxu0
        %381 = vmatprep.mubr.f32.mxu0 0.0
        %382 = vmatmul.mubr.f32.gmra.mrb[0].mxu0 %v266
        %v383 = vpop.f32.mrb[0].mxu0
        %v384 = vadd.f32 0.0, %v383
        %v385 = vpop.f32.mrb[0].mxu0
        %386 = vmatprep.mubr.f32.mxu0 0.0
        %387 = vmatmul.mubr.f32.gmra.mrb[0].mxu0 %v269
        %v388 = vpop.f32.mrb[0].mxu0
        %v389 = vadd.f32 0.0, %v388
        %v390 = vpop.f32.mrb[0].mxu0
        %391 = vmatprep.mubr.f32.mxu0 0.0
        %392 = vmatmul.mubr.f32.gmra.mrb[0].mxu0 %v272
        %v393 = vpop.f32.mrb[0].mxu0
        %v394 = vadd.f32 0.0, %v393
        %v395 = vpop.f32.mrb[0].mxu0
        %396 = vmatprep.mubr.f32.mxu0 0.0
        %397 = vmatmul.mubr.f32.gmra.mrb[0].mxu0 %v275
        %v398 = vpop.f32.mrb[0].mxu0
        %v399 = vadd.f32 0.0, %v398
        %v400 = vpop.f32.mrb[0].mxu0
        %401 = vmatprep.mubr.f32.mxu0 0.0
        %402 = vmatmul.mubr.f32.gmra.mrb[0].mxu0 %v278
        %v403 = vpop.f32.mrb[0].mxu0
        %v404 = vadd.f32 0.0, %v403
        %v405 = vpop.f32.mrb[0].mxu0
        %406 = vmatprep.mubr.f32.mxu0 0.0
        %407 = vmatmul.mubr.f32.gmra.mrb[0].mxu0 %v281
        %v408 = vpop.f32.mrb[0].mxu0
        %v409 = vadd.f32 0.0, %v408
        %v410 = vpop.f32.mrb[0].mxu0
        %411 = vmatprep.mubr.f32.mxu0 0.0
        %412 = vmatmul.mubr.f32.gmra.mrb[0].mxu0 %v284
        %v413 = vpop.f32.mrb[0].mxu0
        %v414 = vadd.f32 0.0, %v413
        %v415 = vpop.f32.mrb[0].mxu0
        %416 = vmatprep.mubr.f32.mxu0 0.0
        %417 = vmatmul.mubr.f32.gmra.mrb[0].mxu0 %v287
        %v418 = vpop.f32.mrb[0].mxu0
        %v419 = vadd.f32 0.0, %v418
        %v420 = vpop.f32.mrb[0].mxu0
        %421 = vmatprep.mubr.f32.mxu0 0.0
        %422 = vmatmul.mubr.f32.gmra.mrb[0].mxu0 %v290
        %v423 = vpop.f32.mrb[0].mxu0
        %v424 = vadd.f32 0.0, %v423
        %v425 = vpop.f32.mrb[0].mxu0
        %426 = vmatprep.mubr.f32.mxu0 0.0
        %427 = vmatmul.mubr.f32.gmra.mrb[0].mxu0 %v293
        %v428 = vpop.f32.mrb[0].mxu0
        %v429 = vadd.f32 0.0, %v428
        %v430 = vpop.f32.mrb[0].mxu0
        %431 = vmatprep.mubr.f32.mxu0 0.0
        %432 = vmatmul.mubr.f32.gmra.mrb[0].mxu0 %v296
        %v433 = vpop.f32.mrb[0].mxu0
        %v434 = vadd.f32 0.0, %v433
        %v435 = vpop.f32.mrb[0].mxu0
        %436 = vmatprep.mubr.f32.mxu0 0.0
        %437 = vmatmul.mubr.f32.gmra.mrb[0].mxu0 %v299
        %v438 = vpop.f32.mrb[0].mxu0
        %v439 = vadd.f32 0.0, %v438
        %v440 = vpop.f32.mrb[0].mxu0
        %441 = vmatprep.mubr.f32.mxu0 0.0
        %442 = vmatmul.mubr.f32.gmra.mrb[0].mxu0 %v302
        %v443 = vpop.f32.mrb[0].mxu0
        %v444 = vadd.f32 0.0, %v443
        %v445 = vpop.f32.mrb[0].mxu0
        %446 = vmatprep.mubr.f32.mxu0 0.0
        %447 = vmatmul.mubr.f32.gmra.mrb[0].mxu0 %v305
        %v448 = vpop.f32.mrb[0].mxu0
        %v449 = vadd.f32 0.0, %v448
        %v450 = vpop.f32.mrb[0].mxu0
        %451 = vdwg.mxu0
        %v452 = vlaneseq
        %v453 = vshrl.u32 %v452, 7
        %v454 = vsub.s32 5, %v453
        %v455 = vrot.slane %v257, %v454
        %v456 = vadd.f32 %v455, %v374
        %v457 = vadd.f32 %v455, %v379
        %v458 = vadd.f32 %v455, %v384
        %v459 = vadd.f32 %v455, %v389
        %v460 = vadd.f32 %v455, %v394
        %v461 = vadd.f32 %v455, %v399
        %v462 = vadd.f32 %v455, %v404
        %v463 = vadd.f32 %v455, %v409
        %v464 = vadd.f32 %v455, %v414
        %v465 = vadd.f32 %v455, %v419
        %v466 = vadd.f32 %v455, %v424
        %v467 = vadd.f32 %v455, %v429
        %v468 = vadd.f32 %v455, %v434
        %v469 = vadd.f32 %v455, %v439
        %v470 = vadd.f32 %v455, %v444
        %v471 = vadd.f32 %v455, %v449
        %472 = vset.pattern.permute.xlu0 3
        %473 = vperm.xlu0 %472, %v241
        %v474 = vpop.permute.xlu0 %473
        %476 = vset.pattern.permute.xlu0 3
        %477 = vperm.xlu0 %476, %v242
        %v478 = vpop.permute.xlu0 %477
        %480 = vset.pattern.permute.xlu0 3
        %481 = vperm.xlu0 %480, %v243
        %v482 = vpop.permute.xlu0 %481
        %484 = vset.pattern.permute.xlu0 3
        %485 = vperm.xlu0 %484, %v244
        %v486 = vpop.permute.xlu0 %485
        %488 = vset.pattern.permute.xlu0 3
        %489 = vperm.xlu0 %488, %v245
        %v490 = vpop.permute.xlu0 %489
        %492 = vset.pattern.permute.xlu0 3
        %493 = vperm.xlu0 %492, %v246
        %v494 = vpop.permute.xlu0 %493
        %496 = vset.pattern.permute.xlu0 3
        %497 = vperm.xlu0 %496, %v247
        %v498 = vpop.permute.xlu0 %497
        %500 = vset.pattern.permute.xlu0 3
        %501 = vperm.xlu0 %500, %v248
        %v502 = vpop.permute.xlu0 %501
        %504 = vset.pattern.permute.xlu0 3
        %505 = vperm.xlu0 %504, %v249
        %v506 = vpop.permute.xlu0 %505
        %508 = vset.pattern.permute.xlu0 3
        %509 = vperm.xlu0 %508, %v250
        %v510 = vpop.permute.xlu0 %509
        %512 = vset.pattern.permute.xlu0 3
        %513 = vperm.xlu0 %512, %v251
        %v514 = vpop.permute.xlu0 %513
        %516 = vset.pattern.permute.xlu0 3
        %517 = vperm.xlu0 %516, %v252
        %v518 = vpop.permute.xlu0 %517
        %520 = vset.pattern.permute.xlu0 3
        %521 = vperm.xlu0 %520, %v253
        %v522 = vpop.permute.xlu0 %521
        %524 = vset.pattern.permute.xlu0 3
        %525 = vperm.xlu0 %524, %v254
        %v526 = vpop.permute.xlu0 %525
        %528 = vset.pattern.permute.xlu0 3
        %529 = vperm.xlu0 %528, %v255
        %v530 = vpop.permute.xlu0 %529
        %532 = vset.pattern.permute.xlu0 3
        %533 = vperm.xlu0 %532, %v256
        %v534 = vpop.permute.xlu0 %533
        %v536 = vadd.f32 %v474, %v456
        %v537 = vadd.f32 %v478, %v457
        %v538 = vadd.f32 %v482, %v458
        %v539 = vadd.f32 %v486, %v459
        %v540 = vadd.f32 %v490, %v460
        %v541 = vadd.f32 %v494, %v461
        %v542 = vadd.f32 %v498, %v462
        %v543 = vadd.f32 %v502, %v463
        %v544 = vadd.f32 %v506, %v464
        %v545 = vadd.f32 %v510, %v465
        %v546 = vadd.f32 %v514, %v466
        %v547 = vadd.f32 %v518, %v467
        %v548 = vadd.f32 %v522, %v468
        %v549 = vadd.f32 %v526, %v469
        %v550 = vadd.f32 %v530, %v470
        %v551 = vadd.f32 %v534, %v471
        %552 = vset.pattern.permute.xlu0 4
        %553 = vperm.xlu0 %552, %v241
        %v554 = vpop.permute.xlu0 %553
        %556 = vset.pattern.permute.xlu0 4
        %557 = vperm.xlu0 %556, %v242
        %v558 = vpop.permute.xlu0 %557
        %560 = vset.pattern.permute.xlu0 4
        %561 = vperm.xlu0 %560, %v243
        %v562 = vpop.permute.xlu0 %561
        %564 = vset.pattern.permute.xlu0 4
        %565 = vperm.xlu0 %564, %v244
        %v566 = vpop.permute.xlu0 %565
        %568 = vset.pattern.permute.xlu0 4
        %569 = vperm.xlu0 %568, %v245
        %v570 = vpop.permute.xlu0 %569
        %572 = vset.pattern.permute.xlu0 4
        %573 = vperm.xlu0 %572, %v246
        %v574 = vpop.permute.xlu0 %573
        %576 = vset.pattern.permute.xlu0 4
        %577 = vperm.xlu0 %576, %v247
        %v578 = vpop.permute.xlu0 %577
        %580 = vset.pattern.permute.xlu0 4
        %581 = vperm.xlu0 %580, %v248
        %v582 = vpop.permute.xlu0 %581
        %584 = vset.pattern.permute.xlu0 4
        %585 = vperm.xlu0 %584, %v249
        %v586 = vpop.permute.xlu0 %585
        %588 = vset.pattern.permute.xlu0 4
        %589 = vperm.xlu0 %588, %v250
        %v590 = vpop.permute.xlu0 %589
        %592 = vset.pattern.permute.xlu0 4
        %593 = vperm.xlu0 %592, %v251
        %v594 = vpop.permute.xlu0 %593
        %596 = vset.pattern.permute.xlu0 4
        %597 = vperm.xlu0 %596, %v252
        %v598 = vpop.permute.xlu0 %597
        %600 = vset.pattern.permute.xlu0 4
        %601 = vperm.xlu0 %600, %v253
        %v602 = vpop.permute.xlu0 %601
        %604 = vset.pattern.permute.xlu0 4
        %605 = vperm.xlu0 %604, %v254
        %v606 = vpop.permute.xlu0 %605
        %608 = vset.pattern.permute.xlu0 4
        %609 = vperm.xlu0 %608, %v255
        %v610 = vpop.permute.xlu0 %609
        %612 = vset.pattern.permute.xlu0 4
        %613 = vperm.xlu0 %612, %v256
        %v614 = vpop.permute.xlu0 %613
        %v616 = vadd.f32 %v554, %v456
        %v617 = vadd.f32 %v558, %v457
        %v618 = vadd.f32 %v562, %v458
        %v619 = vadd.f32 %v566, %v459
        %v620 = vadd.f32 %v570, %v460
        %v621 = vadd.f32 %v574, %v461
        %v622 = vadd.f32 %v578, %v462
        %v623 = vadd.f32 %v582, %v463
        %v624 = vadd.f32 %v586, %v464
        %v625 = vadd.f32 %v590, %v465
        %v626 = vadd.f32 %v594, %v466
        %v627 = vadd.f32 %v598, %v467
        %v628 = vadd.f32 %v602, %v468
        %v629 = vadd.f32 %v606, %v469
        %v630 = vadd.f32 %v610, %v470
        %v631 = vadd.f32 %v614, %v471
        %v632 = vmin.f32 %v536, %v540
        %v633 = vmin.f32 %v537, %v541
        %v634 = vmin.f32 %v538, %v542
        %v635 = vmin.f32 %v539, %v543
        %v636 = vmin.f32 %v632, %v544
        %v637 = vmin.f32 %v633, %v545
        %v638 = vmin.f32 %v634, %v546
        %v639 = vmin.f32 %v635, %v547
        %v640 = vmin.f32 %v636, %v548
        %v641 = vmin.f32 %v637, %v549
        %v642 = vmin.f32 %v638, %v550
        %v643 = vmin.f32 %v639, %v551
        %v644 = vmin.f32 %v640, %v641
        %v645 = vmin.f32 %v642, %v643
        %v646 = vmin.f32 %v644, %v645
        %v647 = vrot.slane %v646, 4
        %v648 = vmin.f32 %v646, %v647
        %v649 = vrot.slane %v648, 2
        %v650 = vmin.f32 %v648, %v649
        %v651 = vrot.slane %v650, 1
        %v652 = vmin.f32 %v650, %v651
        %v653 = vmin.f32 %v616, %v620
        %v654 = vmin.f32 %v617, %v621
        %v655 = vmin.f32 %v618, %v622
        %v656 = vmin.f32 %v619, %v623
        %v657 = vmin.f32 %v653, %v624
        %v658 = vmin.f32 %v654, %v625
        %v659 = vmin.f32 %v655, %v626
        %v660 = vmin.f32 %v656, %v627
        %v661 = vmin.f32 %v657, %v628
        %v662 = vmin.f32 %v658, %v629
        %v663 = vmin.f32 %v659, %v630
        %v664 = vmin.f32 %v660, %v631
        %v665 = vmin.f32 %v661, %v662
        %v666 = vmin.f32 %v663, %v664
        %v667 = vmin.f32 %v665, %v666
        %v668 = vrot.slane %v667, 4
        %v669 = vmin.f32 %v667, %v668
        %v670 = vrot.slane %v669, 2
        %v671 = vmin.f32 %v669, %v670
        %v672 = vrot.slane %v671, 1
        %v673 = vmin.f32 %v671, %v672
        %vm674 = vcmask 1040384
        %v675 = vsel %vm674, %v652, %v673
        %v676 = vld [vmem:[#allocation2] sm:$0x3]
        %v677 = vmin.f32 %v676, %v675
        %678 = vst [vmem:[#allocation2] sm:$0x3] %v677
      $region36: #{hausdorff_distance.5} parent=27 // pred_fallthru
        _
      %p679 = scmp.eq.s32.totalorder %s27, 3
      // Predicated region
      $region37: #{hausdorff_distance.5} parent=27 // pred_check
        %p680 = pneg %p679
      $region38: #{hausdorff_distance.5} parent=27 // pred_check_branch
        %682 = sbr.rel (%p680) target = $region40
      $region39: #{hausdorff_distance.5} parent=27 // pred_region
        %v683 = vld [vmem:[%s216] sm:$0xff]
        %v684 = vld [vmem:[#allocation2] sm:$0x3]
        %v685 = vmax.f32 %v684, 0.0
        %v686 = vrsqrt.pop %v685
        %v687 = vmul.f32 %v685, %v686
        %vm688 = vcmp.eq.f32.partialorder %v685, inf
        %v689 = vsel %vm688, %v685, %v687
        %vm690 = vcmp.eq.f32.partialorder %v685, 0.0
        %v691 = vand.u32 %v685, 2147483648
        %v692 = vsel %vm690, %v691, %v689
        %vm693 = vcmp.gt.f32.partialorder %v683, 0.0
        %v695 = vrot.slane %v692, 2
        %v697 = vsel %vm693, %v695, 0.0
        %698 = vst [vmem:[%s224 - $0x6] sm:$0xc0] %v697
      $region40: #{hausdorff_distance.5} parent=27 // pred_fallthru
        _
      %p699 = scmp.lt.s32.totalorder %s25, 1
      %s700 = scalar_select %p699, %s25, 1
      %p701 = scmp.lt.s32.totalorder %s26, 3
      %s702 = scalar_select %p701, %s26, 3
      %s703 = smul.addr %s700, 4
      %s704 = sadd.s32 %s702, %s703
      %s705 = smul.addr %s704, 2
      %s706 = scalar_lea.vmem %s3, %s705
      // Predicated region
      $region41: #{hausdorff_distance.5} parent=27 // pred_check
        %p707 = pneg %p115
      $region42: #{hausdorff_distance.5} parent=27 // pred_check_branch
        %709 = sbr.rel (%p707) target = $region44
      $region43: #{hausdorff_distance.5} parent=27 // pred_region
        _
      $region44: #{hausdorff_distance.5} parent=27 // pred_fallthru
        _
    $region28: #{hausdorff_distance.5} parent=5 // pred_fallthru
      _
    %p710 = scmp.le.s32.totalorder 2, %s15
    // Predicated region
    $region45: #{hausdorff_distance.5} parent=5 // pred_check
      %p711 = pneg %p710
    $region46: #{hausdorff_distance.5} parent=5 // pred_check_branch
      %713 = sbr.rel (%p711) target = $region48
    $region47: #{hausdorff_distance.5} parent=5 // pred_region
      %s714 = ssub.s32 %s15, 2
      // Predicated region
      $region49: #{hausdorff_distance.5} parent=47 // pred_check
        %p715 = pneg %p121
      $region50: #{hausdorff_distance.5} parent=47 // pred_check_branch
        %717 = sbr.rel (%p715) target = $region52
      $region51: #{hausdorff_distance.5} parent=47 // pred_region
        %p718 = scmp.lt.s32.totalorder %s28, 1
        %s719 = scalar_select %p718, %s28, 1
        %p720 = scmp.lt.s32.totalorder %s29, 3
        %s721 = scalar_select %p720, %s29, 3
        %s722 = smul.addr %s719, 4
        %s723 = sadd.s32 %s721, %s722
        %s724 = smul.addr %s723, 2
        %s725 = scalar_lea.vmem %s3, %s724
      $region52: #{hausdorff_distance.5} parent=47 // pred_fallthru
        _
    $region48: #{hausdorff_distance.5} parent=5 // pred_fallthru
      _
  $region6: #{hausdorff_distance.5} parent=0 // loop_footer
    %s19 = sadd.s32 1, %s15
  $region7: #{hausdorff_distance.5} parent=0 // loop_footer_branch
    %14 = sbr.rel target = $region3
  $region8: #{hausdorff_distance.5} parent=0 // loop_exit
    _

</llo_original>
